<compile_context>
chip_gen: v7x
topology: tpu7x:2x2x1
jax: 0.10.0
libtpu: 0.0.40
codegen_flags: <defaults>
</compile_context>

<pallas_src>
import math
import jax
import jax.numpy as jnp
from jax.experimental import pallas as pl
from jax.experimental.pallas import tpu as pltpu

# ---------------- configuration (small, consistent with the module) -------------
B = 2          # batch size
SQ = 8         # q sequence length
SK = 8         # kv sequence length
E = 32         # emb_dim
H = 4          # num_heads
DK = E // H    # dim_k  (default in the module)
HD = H * DK    # dim_k * num_heads


def mha_kernel(q_ref, k_ref, v_ref, mask_ref,
               wqkv_ref, bqkv_ref, wo_ref, bo_ref,
               out_ref, scores_ref):
    """Whole problem in one invocation; everything fits in VMEM at these sizes."""
    # Fold batch into the sublane dim for the projections.
    q2 = q_ref[...].reshape(B * SQ, E)
    k2 = k_ref[...].reshape(B * SK, E)
    v2 = v_ref[...].reshape(B * SK, E)

    # Fused, lane-dense projections: one (B*S, E) @ (E, HD) dot (N = 32 lanes) per
    # input tensor instead of 12 N=8 dots, plus a single lane-dense bias add each.
    # wqkv_ref[i] / bqkv_ref[i] are zero-cost leading-dim indexes (no lane slicing).
    qp = (jnp.dot(q2, wqkv_ref[0], preferred_element_type=jnp.float32)
          + bqkv_ref[0]).reshape(B, SQ, HD)
    kp = (jnp.dot(k2, wqkv_ref[1], preferred_element_type=jnp.float32)
          + bqkv_ref[1]).reshape(B, SK, HD)
    vp = (jnp.dot(v2, wqkv_ref[2], preferred_element_type=jnp.float32)
          + bqkv_ref[2]).reshape(B, SK, HD)

    # Hoisted mask compare + broadcast (computed exactly once) and constants.
    masked = jnp.broadcast_to(mask_ref[...] == 0, (B, SQ, SK))
    neg = jnp.float32(-1e9)
    scale = jnp.float32(1.0 / math.sqrt(DK))

    attn_blocks = []
    score_blocks = []
    for h in range(H):                         # static unroll over heads
        sl = slice(h * DK, (h + 1) * DK)       # static lane slice of projections
        qh = qp[:, :, sl]                      # (B, SQ, DK)
        kh = kp[:, :, sl]                      # (B, SK, DK)
        vh = vp[:, :, sl]                      # (B, SK, DK)

        # scores = q @ k^T / sqrt(dk), then masked_fill(mask == 0, -1e9)
        s = jnp.einsum("bqd,bkd->bqk", qh, kh,
                       preferred_element_type=jnp.float32) * scale
        s = jnp.where(masked, neg, s)          # (B, SQ, SK)
        score_blocks.append(s)

        # numerically stable softmax over the kv axis (exact divide for parity)
        p = jnp.exp(s - jnp.max(s, axis=-1, keepdims=True))
        p = p / jnp.sum(p, axis=-1, keepdims=True)

        attn = jnp.einsum("bqk,bkd->bqd", p, vh,
                          preferred_element_type=jnp.float32)      # (B, SQ, DK)
        attn_blocks.append(attn.reshape(B * SQ, DK))

    # Fused output projection: lane-concat heads -> (B*SQ, HD), one MXU dot.
    concat = jnp.concatenate(attn_blocks, axis=-1)                 # (16, 32)
    out = jnp.dot(concat, wo_ref[...],
                  preferred_element_type=jnp.float32) + bo_ref[...]
    out_ref[...] = out.reshape(B, SQ, E)

    # Lane-dense scores store: heads concatenated along lanes -> (B, SQ, H*SK).
    scores_ref[...] = jnp.concatenate(score_blocks, axis=-1)


def multi_head_attention(q, k, v, mask, params):
    """params: wq/wk/wv (E, H*DK), bq/bk/bv (1, H*DK), wo (H*DK, E), bo (1, E)."""
    # Host-side packing: stacked lane-dense weights/biases (no 8-lane-wide tiles).
    wqkv = jnp.stack([params["wq"], params["wk"], params["wv"]], axis=0)  # (3, E, HD)
    bqkv = jnp.stack([params["bq"], params["bk"], params["bv"]], axis=0)  # (3, 1, HD)
    wo = params["wo"]                                                     # (HD, E)
    bo = params["bo"]                                                     # (1, E)

    full = lambda shape: pl.BlockSpec(shape, lambda i: (0,) * len(shape))

    out, scores_packed = pl.pallas_call(
        mha_kernel,
        out_shape=(
            jax.ShapeDtypeStruct((B, SQ, E), jnp.float32),
            jax.ShapeDtypeStruct((B, SQ, H * SK), jnp.float32),   # lane-dense store
        ),
        grid_spec=pltpu.PrefetchScalarGridSpec(
            num_scalar_prefetch=0,
            grid=(1,),                                  # single invocation
            in_specs=[
                full((B, SQ, E)),        # q
                full((B, SK, E)),        # k
                full((B, SK, E)),        # v
                full((B, 1, SK)),        # mask
                full((3, E, HD)),        # stacked q/k/v weights (lane-dense)
                full((3, 1, HD)),        # stacked q/k/v biases (lane-dense)
                full((HD, E)),           # output projection weight
                full((1, E)),            # output projection bias
            ],
            out_specs=(full((B, SQ, E)), full((B, SQ, H * SK))),
        ),
        compiler_params=pltpu.CompilerParams(
            dimension_semantics=("arbitrary",)),
    )(q, k, v, mask, wqkv, bqkv, wo, bo)

    # Caller-facing layout (B, H, SQ, SK): cheap reshape/transpose in XLA, outside
    # the kernel, so the in-kernel store stays lane-dense.
    scores = scores_packed.reshape(B, SQ, H, SK).transpose(0, 2, 1, 3)
    return out, scores


def reference(q, k, v, mask, params):
    """Pure-JAX reference mirroring the PyTorch forward (eval mode, no dropout)."""
    qp = q @ params["wq"] + params["bq"][0]
    kp = k @ params["wk"] + params["bk"][0]
    vp = v @ params["wv"] + params["bv"][0]

    def split(x):  # (B, S, H*DK) -> (B, H, S, DK)
        return x.reshape(B, -1, H, DK).transpose(0, 2, 1, 3)

    qh, kh, vh = split(qp), split(kp), split(vp)
    scores = jnp.einsum("bhqd,bhkd->bhqk", qh, kh) / math.sqrt(DK)
    m = mask[:, None, :, :]                      # (B,1,1,SK)
    scores = jnp.where(m == 0, jnp.float32(-1e9), scores)
    soft = jax.nn.softmax(scores, axis=-1)
    attn = jnp.einsum("bhqk,bhkd->bhqd", soft, vh)
    concat = attn.transpose(0, 2, 1, 3).reshape(B, -1, HD)
    out = concat @ params["wo"] + params["bo"][0]
    return out, scores


if __name__ == "__main__":
    key = jax.random.PRNGKey(0)
    ks = jax.random.split(key, 12)

    # Deterministic parameter init (shapes from the nn.Linear layers in __init__).
    # PyTorch Linear stores weight as (out, in); here stored transposed (in, out).
    scale_lin = 1.0 / math.sqrt(E)
    scale_out = 1.0 / math.sqrt(HD)
    params = {
        "wq": jax.random.uniform(ks[0], (E, HD), jnp.float32, -scale_lin, scale_lin),
        "bq": jax.random.uniform(ks[1], (1, HD), jnp.float32, -scale_lin, scale_lin),
        "wk": jax.random.uniform(ks[2], (E, HD), jnp.float32, -scale_lin, scale_lin),
        "bk": jax.random.uniform(ks[3], (1, HD), jnp.float32, -scale_lin, scale_lin),
        "wv": jax.random.uniform(ks[4], (E, HD), jnp.float32, -scale_lin, scale_lin),
        "bv": jax.random.uniform(ks[5], (1, HD), jnp.float32, -scale_lin, scale_lin),
        "wo": jax.random.uniform(ks[6], (HD, E), jnp.float32, -scale_out, scale_out),
        "bo": jax.random.uniform(ks[7], (1, E), jnp.float32, -scale_out, scale_out),
    }

    q = jax.random.normal(ks[8], (B, SQ, E), jnp.float32)
    k = jax.random.normal(ks[9], (B, SK, E), jnp.float32)
    v = jax.random.normal(ks[10], (B, SK, E), jnp.float32)
    # source mask (batch, 1, kv_seq): mask out the last 2 kv positions of batch 1
    mask = jnp.ones((B, 1, SK), jnp.int32).at[1, 0, -2:].set(0)

    out, scores = multi_head_attention(q, k, v, mask, params)
    jax.block_until_ready((out, scores))

    out_ref, scores_ref = reference(q, k, v, mask, params)
    assert out.shape == (B, SQ, E) and scores.shape == (B, H, SQ, SK)
    # Pre-softmax scores and output are exact modulo f32 matmul reassociation
    # (exact softmax divide in the kernel) -> tight tolerances.
    assert jnp.allclose(scores, scores_ref, atol=1e-4, rtol=1e-4)
    assert jnp.allclose(out, out_ref, atol=1e-4, rtol=1e-4)

    print("KERNEL_OK")
</pallas_src>

<mosaic_0001>
module attributes {stable_mosaic.version = 11 : i64} {
  func.func @mha_kernel(%arg0: i32, %arg1: memref<2x8x32xf32, #tpu.memory_space<vmem>>, %arg2: memref<2x8x32xf32, #tpu.memory_space<vmem>>, %arg3: memref<2x8x32xf32, #tpu.memory_space<vmem>>, %arg4: memref<2x1x8xi32, #tpu.memory_space<vmem>>, %arg5: memref<3x32x32xf32, #tpu.memory_space<vmem>>, %arg6: memref<3x1x32xf32, #tpu.memory_space<vmem>>, %arg7: memref<32x32xf32, #tpu.memory_space<vmem>>, %arg8: memref<1x32xf32, #tpu.memory_space<vmem>>, %arg9: memref<2x8x32xf32, #tpu.memory_space<vmem>>, %arg10: memref<2x8x32xf32, #tpu.memory_space<vmem>>) attributes {dimension_semantics = [#tpu.dimension_semantics<arbitrary>], iteration_bounds = array<i64: 1>, scalar_prefetch = 0 : i64, scratch_operands = 0 : i64, tpu.core_type = #tpu.core_type<tc>, window_params = [{pipeline_mode = #tpu.pipeline_mode<synchronous>, transform_indices = @transform_0, window_bounds = array<i64: 2, 8, 32>}, {pipeline_mode = #tpu.pipeline_mode<synchronous>, transform_indices = @transform_1, window_bounds = array<i64: 2, 8, 32>}, {pipeline_mode = #tpu.pipeline_mode<synchronous>, transform_indices = @transform_2, window_bounds = array<i64: 2, 8, 32>}, {pipeline_mode = #tpu.pipeline_mode<synchronous>, transform_indices = @transform_3, window_bounds = array<i64: 2, 1, 8>}, {pipeline_mode = #tpu.pipeline_mode<synchronous>, transform_indices = @transform_4, window_bounds = array<i64: 3, 32, 32>}, {pipeline_mode = #tpu.pipeline_mode<synchronous>, transform_indices = @transform_5, window_bounds = array<i64: 3, 1, 32>}, {pipeline_mode = #tpu.pipeline_mode<synchronous>, transform_indices = @transform_6, window_bounds = array<i64: 32, 32>}, {pipeline_mode = #tpu.pipeline_mode<synchronous>, transform_indices = @transform_7, window_bounds = array<i64: 1, 32>}, {pipeline_mode = #tpu.pipeline_mode<synchronous>, transform_indices = @transform_8, window_bounds = array<i64: 2, 8, 32>}, {pipeline_mode = #tpu.pipeline_mode<synchronous>, transform_indices = @transform_9, window_bounds = array<i64: 2, 8, 32>}]} {
    %c0 = arith.constant 0 : index
    %c0_0 = arith.constant 0 : index
    %c0_1 = arith.constant 0 : index
    %0 = vector.load %arg1[%c0, %c0_0, %c0_1] : memref<2x8x32xf32, #tpu.memory_space<vmem>>, vector<2x8x32xf32>
    %1 = vector.shape_cast %0 : vector<2x8x32xf32> to vector<16x32xf32>
    %c0_2 = arith.constant 0 : index
    %c0_3 = arith.constant 0 : index
    %c0_4 = arith.constant 0 : index
    %2 = vector.load %arg2[%c0_2, %c0_3, %c0_4] : memref<2x8x32xf32, #tpu.memory_space<vmem>>, vector<2x8x32xf32>
    %3 = vector.shape_cast %2 : vector<2x8x32xf32> to vector<16x32xf32>
    %c0_5 = arith.constant 0 : index
    %c0_6 = arith.constant 0 : index
    %c0_7 = arith.constant 0 : index
    %4 = vector.load %arg3[%c0_5, %c0_6, %c0_7] : memref<2x8x32xf32, #tpu.memory_space<vmem>>, vector<2x8x32xf32>
    %5 = vector.shape_cast %4 : vector<2x8x32xf32> to vector<16x32xf32>
    %c0_8 = arith.constant 0 : index
    %c0_9 = arith.constant 0 : index
    %c0_10 = arith.constant 0 : index
    %6 = vector.load %arg5[%c0_8, %c0_9, %c0_10] : memref<3x32x32xf32, #tpu.memory_space<vmem>>, vector<1x32x32xf32>
    %7 = vector.shape_cast %6 : vector<1x32x32xf32> to vector<32x32xf32>
    %cst = arith.constant dense<0.000000e+00> : vector<16x32xf32>
    %8 = tpu.matmul %1, %7, %cst {dimension_numbers = #tpu.dot_dimension_numbers<[1], [0], [0], [1], [0, 0, 1, 1], [], []>} : vector<16x32xf32>, vector<32x32xf32>, vector<16x32xf32> -> vector<16x32xf32>
    %c0_11 = arith.constant 0 : index
    %c0_12 = arith.constant 0 : index
    %c0_13 = arith.constant 0 : index
    %9 = vector.load %arg6[%c0_11, %c0_12, %c0_13] : memref<3x1x32xf32, #tpu.memory_space<vmem>>, vector<1x1x32xf32>
    %10 = vector.shape_cast %9 : vector<1x1x32xf32> to vector<1x32xf32>
    %11 = vector.broadcast %10 : vector<1x32xf32> to vector<16x32xf32>
    %12 = arith.addf %8, %11 : vector<16x32xf32>
    %13 = vector.shape_cast %12 : vector<16x32xf32> to vector<2x8x32xf32>
    %c1 = arith.constant 1 : index
    %c0_14 = arith.constant 0 : index
    %c0_15 = arith.constant 0 : index
    %14 = vector.load %arg5[%c1, %c0_14, %c0_15] : memref<3x32x32xf32, #tpu.memory_space<vmem>>, vector<1x32x32xf32>
    %15 = vector.shape_cast %14 : vector<1x32x32xf32> to vector<32x32xf32>
    %cst_16 = arith.constant dense<0.000000e+00> : vector<16x32xf32>
    %16 = tpu.matmul %3, %15, %cst_16 {dimension_numbers = #tpu.dot_dimension_numbers<[1], [0], [0], [1], [0, 0, 1, 1], [], []>} : vector<16x32xf32>, vector<32x32xf32>, vector<16x32xf32> -> vector<16x32xf32>
    %c1_17 = arith.constant 1 : index
    %c0_18 = arith.constant 0 : index
    %c0_19 = arith.constant 0 : index
    %17 = vector.load %arg6[%c1_17, %c0_18, %c0_19] : memref<3x1x32xf32, #tpu.memory_space<vmem>>, vector<1x1x32xf32>
    %18 = vector.shape_cast %17 : vector<1x1x32xf32> to vector<1x32xf32>
    %19 = vector.broadcast %18 : vector<1x32xf32> to vector<16x32xf32>
    %20 = arith.addf %16, %19 : vector<16x32xf32>
    %21 = vector.shape_cast %20 : vector<16x32xf32> to vector<2x8x32xf32>
    %c2 = arith.constant 2 : index
    %c0_20 = arith.constant 0 : index
    %c0_21 = arith.constant 0 : index
    %22 = vector.load %arg5[%c2, %c0_20, %c0_21] : memref<3x32x32xf32, #tpu.memory_space<vmem>>, vector<1x32x32xf32>
    %23 = vector.shape_cast %22 : vector<1x32x32xf32> to vector<32x32xf32>
    %cst_22 = arith.constant dense<0.000000e+00> : vector<16x32xf32>
    %24 = tpu.matmul %5, %23, %cst_22 {dimension_numbers = #tpu.dot_dimension_numbers<[1], [0], [0], [1], [0, 0, 1, 1], [], []>} : vector<16x32xf32>, vector<32x32xf32>, vector<16x32xf32> -> vector<16x32xf32>
    %c2_23 = arith.constant 2 : index
    %c0_24 = arith.constant 0 : index
    %c0_25 = arith.constant 0 : index
    %25 = vector.load %arg6[%c2_23, %c0_24, %c0_25] : memref<3x1x32xf32, #tpu.memory_space<vmem>>, vector<1x1x32xf32>
    %26 = vector.shape_cast %25 : vector<1x1x32xf32> to vector<1x32xf32>
    %27 = vector.broadcast %26 : vector<1x32xf32> to vector<16x32xf32>
    %28 = arith.addf %24, %27 : vector<16x32xf32>
    %29 = vector.shape_cast %28 : vector<16x32xf32> to vector<2x8x32xf32>
    %c0_26 = arith.constant 0 : index
    %c0_27 = arith.constant 0 : index
    %c0_28 = arith.constant 0 : index
    %30 = vector.load %arg4[%c0_26, %c0_27, %c0_28] : memref<2x1x8xi32, #tpu.memory_space<vmem>>, vector<2x1x8xi32>
    %c0_i32 = arith.constant 0 : i32
    %31 = vector.broadcast %c0_i32 : i32 to vector<2x1x8xi32>
    %32 = arith.cmpi eq, %30, %31 : vector<2x1x8xi32>
    %33 = vector.shape_cast %32 : vector<2x1x8xi1> to vector<2x1x8xi1>
    %34 = vector.broadcast %33 : vector<2x1x8xi1> to vector<2x8x8xi1>
    %35 = vector.extract_strided_slice %13 {offsets = [0, 0, 0], sizes = [2, 8, 8], strides = [1, 1, 1]} : vector<2x8x32xf32> to vector<2x8x8xf32>
    %36 = vector.extract_strided_slice %21 {offsets = [0, 0, 0], sizes = [2, 8, 8], strides = [1, 1, 1]} : vector<2x8x32xf32> to vector<2x8x8xf32>
    %37 = vector.extract_strided_slice %29 {offsets = [0, 0, 0], sizes = [2, 8, 8], strides = [1, 1, 1]} : vector<2x8x32xf32> to vector<2x8x8xf32>
    "tpu.trace_start"() <{level = 10 : i32, message = "bqd,bkd->bqk"}> : () -> ()
    %cst_29 = arith.constant dense<0.000000e+00> : vector<2x8x8xf32>
    %38 = tpu.matmul %35, %36, %cst_29 {dimension_numbers = #tpu.dot_dimension_numbers<[2], [2], [1], [1], [0, 0, 0, 1, 1, 1], [0], [0]>} : vector<2x8x8xf32>, vector<2x8x8xf32>, vector<2x8x8xf32> -> vector<2x8x8xf32>
    "tpu.trace_stop"() : () -> ()
    %cst_30 = arith.constant 0.353553385 : f32
    %39 = vector.broadcast %cst_30 : f32 to vector<2x8x8xf32>
    %40 = arith.mulf %38, %39 : vector<2x8x8xf32>
    %cst_31 = arith.constant -1.000000e+09 : f32
    %41 = vector.broadcast %cst_31 : f32 to vector<2x8x8xf32>
    %42 = arith.select %34, %41, %40 : vector<2x8x8xi1>, vector<2x8x8xf32>
    %cst_32 = arith.constant dense<0xFF800000> : vector<2x8xf32>
    %43 = vector.multi_reduction <maximumf>, %42, %cst_32 [2] : vector<2x8x8xf32> to vector<2x8xf32>
    %44 = vector.shape_cast %43 : vector<2x8xf32> to vector<2x8x1xf32>
    %45 = vector.broadcast %44 : vector<2x8x1xf32> to vector<2x8x8xf32>
    %46 = arith.subf %42, %45 : vector<2x8x8xf32>
    %47 = math.exp %46 : vector<2x8x8xf32>
    %cst_33 = arith.constant dense<0.000000e+00> : vector<2x8xf32>
    %48 = vector.multi_reduction <add>, %47, %cst_33 [2] : vector<2x8x8xf32> to vector<2x8xf32>
    %49 = vector.shape_cast %48 : vector<2x8xf32> to vector<2x8x1xf32>
    %50 = vector.broadcast %49 : vector<2x8x1xf32> to vector<2x8x8xf32>
    %51 = arith.divf %47, %50 : vector<2x8x8xf32>
    "tpu.trace_start"() <{level = 10 : i32, message = "bqk,bkd->bqd"}> : () -> ()
    %cst_34 = arith.constant dense<0.000000e+00> : vector<2x8x8xf32>
    %52 = tpu.matmul %51, %37, %cst_34 {dimension_numbers = #tpu.dot_dimension_numbers<[2], [1], [1], [2], [0, 0, 0, 1, 1, 2], [0], [0]>} : vector<2x8x8xf32>, vector<2x8x8xf32>, vector<2x8x8xf32> -> vector<2x8x8xf32>
    "tpu.trace_stop"() : () -> ()
    %53 = vector.shape_cast %52 : vector<2x8x8xf32> to vector<16x8xf32>
    %54 = vector.extract_strided_slice %13 {offsets = [0, 0, 8], sizes = [2, 8, 8], strides = [1, 1, 1]} : vector<2x8x32xf32> to vector<2x8x8xf32>
    %55 = vector.extract_strided_slice %21 {offsets = [0, 0, 8], sizes = [2, 8, 8], strides = [1, 1, 1]} : vector<2x8x32xf32> to vector<2x8x8xf32>
    %56 = vector.extract_strided_slice %29 {offsets = [0, 0, 8], sizes = [2, 8, 8], strides = [1, 1, 1]} : vector<2x8x32xf32> to vector<2x8x8xf32>
    "tpu.trace_start"() <{level = 10 : i32, message = "bqd,bkd->bqk"}> : () -> ()
    %cst_35 = arith.constant dense<0.000000e+00> : vector<2x8x8xf32>
    %57 = tpu.matmul %54, %55, %cst_35 {dimension_numbers = #tpu.dot_dimension_numbers<[2], [2], [1], [1], [0, 0, 0, 1, 1, 1], [0], [0]>} : vector<2x8x8xf32>, vector<2x8x8xf32>, vector<2x8x8xf32> -> vector<2x8x8xf32>
    "tpu.trace_stop"() : () -> ()
    %cst_36 = arith.constant 0.353553385 : f32
    %58 = vector.broadcast %cst_36 : f32 to vector<2x8x8xf32>
    %59 = arith.mulf %57, %58 : vector<2x8x8xf32>
    %cst_37 = arith.constant -1.000000e+09 : f32
    %60 = vector.broadcast %cst_37 : f32 to vector<2x8x8xf32>
    %61 = arith.select %34, %60, %59 : vector<2x8x8xi1>, vector<2x8x8xf32>
    %cst_38 = arith.constant dense<0xFF800000> : vector<2x8xf32>
    %62 = vector.multi_reduction <maximumf>, %61, %cst_38 [2] : vector<2x8x8xf32> to vector<2x8xf32>
    %63 = vector.shape_cast %62 : vector<2x8xf32> to vector<2x8x1xf32>
    %64 = vector.broadcast %63 : vector<2x8x1xf32> to vector<2x8x8xf32>
    %65 = arith.subf %61, %64 : vector<2x8x8xf32>
    %66 = math.exp %65 : vector<2x8x8xf32>
    %cst_39 = arith.constant dense<0.000000e+00> : vector<2x8xf32>
    %67 = vector.multi_reduction <add>, %66, %cst_39 [2] : vector<2x8x8xf32> to vector<2x8xf32>
    %68 = vector.shape_cast %67 : vector<2x8xf32> to vector<2x8x1xf32>
    %69 = vector.broadcast %68 : vector<2x8x1xf32> to vector<2x8x8xf32>
    %70 = arith.divf %66, %69 : vector<2x8x8xf32>
    "tpu.trace_start"() <{level = 10 : i32, message = "bqk,bkd->bqd"}> : () -> ()
    %cst_40 = arith.constant dense<0.000000e+00> : vector<2x8x8xf32>
    %71 = tpu.matmul %70, %56, %cst_40 {dimension_numbers = #tpu.dot_dimension_numbers<[2], [1], [1], [2], [0, 0, 0, 1, 1, 2], [0], [0]>} : vector<2x8x8xf32>, vector<2x8x8xf32>, vector<2x8x8xf32> -> vector<2x8x8xf32>
    "tpu.trace_stop"() : () -> ()
    %72 = vector.shape_cast %71 : vector<2x8x8xf32> to vector<16x8xf32>
    %73 = vector.extract_strided_slice %13 {offsets = [0, 0, 16], sizes = [2, 8, 8], strides = [1, 1, 1]} : vector<2x8x32xf32> to vector<2x8x8xf32>
    %74 = vector.extract_strided_slice %21 {offsets = [0, 0, 16], sizes = [2, 8, 8], strides = [1, 1, 1]} : vector<2x8x32xf32> to vector<2x8x8xf32>
    %75 = vector.extract_strided_slice %29 {offsets = [0, 0, 16], sizes = [2, 8, 8], strides = [1, 1, 1]} : vector<2x8x32xf32> to vector<2x8x8xf32>
    "tpu.trace_start"() <{level = 10 : i32, message = "bqd,bkd->bqk"}> : () -> ()
    %cst_41 = arith.constant dense<0.000000e+00> : vector<2x8x8xf32>
    %76 = tpu.matmul %73, %74, %cst_41 {dimension_numbers = #tpu.dot_dimension_numbers<[2], [2], [1], [1], [0, 0, 0, 1, 1, 1], [0], [0]>} : vector<2x8x8xf32>, vector<2x8x8xf32>, vector<2x8x8xf32> -> vector<2x8x8xf32>
    "tpu.trace_stop"() : () -> ()
    %cst_42 = arith.constant 0.353553385 : f32
    %77 = vector.broadcast %cst_42 : f32 to vector<2x8x8xf32>
    %78 = arith.mulf %76, %77 : vector<2x8x8xf32>
    %cst_43 = arith.constant -1.000000e+09 : f32
    %79 = vector.broadcast %cst_43 : f32 to vector<2x8x8xf32>
    %80 = arith.select %34, %79, %78 : vector<2x8x8xi1>, vector<2x8x8xf32>
    %cst_44 = arith.constant dense<0xFF800000> : vector<2x8xf32>
    %81 = vector.multi_reduction <maximumf>, %80, %cst_44 [2] : vector<2x8x8xf32> to vector<2x8xf32>
    %82 = vector.shape_cast %81 : vector<2x8xf32> to vector<2x8x1xf32>
    %83 = vector.broadcast %82 : vector<2x8x1xf32> to vector<2x8x8xf32>
    %84 = arith.subf %80, %83 : vector<2x8x8xf32>
    %85 = math.exp %84 : vector<2x8x8xf32>
    %cst_45 = arith.constant dense<0.000000e+00> : vector<2x8xf32>
    %86 = vector.multi_reduction <add>, %85, %cst_45 [2] : vector<2x8x8xf32> to vector<2x8xf32>
    %87 = vector.shape_cast %86 : vector<2x8xf32> to vector<2x8x1xf32>
    %88 = vector.broadcast %87 : vector<2x8x1xf32> to vector<2x8x8xf32>
    %89 = arith.divf %85, %88 : vector<2x8x8xf32>
    "tpu.trace_start"() <{level = 10 : i32, message = "bqk,bkd->bqd"}> : () -> ()
    %cst_46 = arith.constant dense<0.000000e+00> : vector<2x8x8xf32>
    %90 = tpu.matmul %89, %75, %cst_46 {dimension_numbers = #tpu.dot_dimension_numbers<[2], [1], [1], [2], [0, 0, 0, 1, 1, 2], [0], [0]>} : vector<2x8x8xf32>, vector<2x8x8xf32>, vector<2x8x8xf32> -> vector<2x8x8xf32>
    "tpu.trace_stop"() : () -> ()
    %91 = vector.shape_cast %90 : vector<2x8x8xf32> to vector<16x8xf32>
    %92 = vector.extract_strided_slice %13 {offsets = [0, 0, 24], sizes = [2, 8, 8], strides = [1, 1, 1]} : vector<2x8x32xf32> to vector<2x8x8xf32>
    %93 = vector.extract_strided_slice %21 {offsets = [0, 0, 24], sizes = [2, 8, 8], strides = [1, 1, 1]} : vector<2x8x32xf32> to vector<2x8x8xf32>
    %94 = vector.extract_strided_slice %29 {offsets = [0, 0, 24], sizes = [2, 8, 8], strides = [1, 1, 1]} : vector<2x8x32xf32> to vector<2x8x8xf32>
    "tpu.trace_start"() <{level = 10 : i32, message = "bqd,bkd->bqk"}> : () -> ()
    %cst_47 = arith.constant dense<0.000000e+00> : vector<2x8x8xf32>
    %95 = tpu.matmul %92, %93, %cst_47 {dimension_numbers = #tpu.dot_dimension_numbers<[2], [2], [1], [1], [0, 0, 0, 1, 1, 1], [0], [0]>} : vector<2x8x8xf32>, vector<2x8x8xf32>, vector<2x8x8xf32> -> vector<2x8x8xf32>
    "tpu.trace_stop"() : () -> ()
    %cst_48 = arith.constant 0.353553385 : f32
    %96 = vector.broadcast %cst_48 : f32 to vector<2x8x8xf32>
    %97 = arith.mulf %95, %96 : vector<2x8x8xf32>
    %cst_49 = arith.constant -1.000000e+09 : f32
    %98 = vector.broadcast %cst_49 : f32 to vector<2x8x8xf32>
    %99 = arith.select %34, %98, %97 : vector<2x8x8xi1>, vector<2x8x8xf32>
    %cst_50 = arith.constant dense<0xFF800000> : vector<2x8xf32>
    %100 = vector.multi_reduction <maximumf>, %99, %cst_50 [2] : vector<2x8x8xf32> to vector<2x8xf32>
    %101 = vector.shape_cast %100 : vector<2x8xf32> to vector<2x8x1xf32>
    %102 = vector.broadcast %101 : vector<2x8x1xf32> to vector<2x8x8xf32>
    %103 = arith.subf %99, %102 : vector<2x8x8xf32>
    %104 = math.exp %103 : vector<2x8x8xf32>
    %cst_51 = arith.constant dense<0.000000e+00> : vector<2x8xf32>
    %105 = vector.multi_reduction <add>, %104, %cst_51 [2] : vector<2x8x8xf32> to vector<2x8xf32>
    %106 = vector.shape_cast %105 : vector<2x8xf32> to vector<2x8x1xf32>
    %107 = vector.broadcast %106 : vector<2x8x1xf32> to vector<2x8x8xf32>
    %108 = arith.divf %104, %107 : vector<2x8x8xf32>
    "tpu.trace_start"() <{level = 10 : i32, message = "bqk,bkd->bqd"}> : () -> ()
    %cst_52 = arith.constant dense<0.000000e+00> : vector<2x8x8xf32>
    %109 = tpu.matmul %108, %94, %cst_52 {dimension_numbers = #tpu.dot_dimension_numbers<[2], [1], [1], [2], [0, 0, 0, 1, 1, 2], [0], [0]>} : vector<2x8x8xf32>, vector<2x8x8xf32>, vector<2x8x8xf32> -> vector<2x8x8xf32>
    "tpu.trace_stop"() : () -> ()
    %110 = vector.shape_cast %109 : vector<2x8x8xf32> to vector<16x8xf32>
    %111 = tpu.concatenate %53, %72, %91, %110 in 1 : vector<16x8xf32>, vector<16x8xf32>, vector<16x8xf32>, vector<16x8xf32> -> vector<16x32xf32>
    %c0_53 = arith.constant 0 : index
    %c0_54 = arith.constant 0 : index
    %112 = vector.load %arg7[%c0_53, %c0_54] : memref<32x32xf32, #tpu.memory_space<vmem>>, vector<32x32xf32>
    %cst_55 = arith.constant dense<0.000000e+00> : vector<16x32xf32>
    %113 = tpu.matmul %111, %112, %cst_55 {dimension_numbers = #tpu.dot_dimension_numbers<[1], [0], [0], [1], [0, 0, 1, 1], [], []>} : vector<16x32xf32>, vector<32x32xf32>, vector<16x32xf32> -> vector<16x32xf32>
    %c0_56 = arith.constant 0 : index
    %c0_57 = arith.constant 0 : index
    %114 = vector.load %arg8[%c0_56, %c0_57] : memref<1x32xf32, #tpu.memory_space<vmem>>, vector<1x32xf32>
    %115 = vector.broadcast %114 : vector<1x32xf32> to vector<16x32xf32>
    %116 = arith.addf %113, %115 : vector<16x32xf32>
    %117 = vector.shape_cast %116 : vector<16x32xf32> to vector<2x8x32xf32>
    %c0_58 = arith.constant 0 : index
    %c0_59 = arith.constant 0 : index
    %c0_60 = arith.constant 0 : index
    %118 = vector.load %arg9[%c0_58, %c0_59, %c0_60] : memref<2x8x32xf32, #tpu.memory_space<vmem>>, vector<2x8x32xf32>
    tpu.vector_store %arg9[%c0_58, %c0_59, %c0_60], %117 {strides = array<i32>} : memref<2x8x32xf32, #tpu.memory_space<vmem>>, vector<2x8x32xf32>,
    %119 = tpu.concatenate %42, %61, %80, %99 in 2 : vector<2x8x8xf32>, vector<2x8x8xf32>, vector<2x8x8xf32>, vector<2x8x8xf32> -> vector<2x8x32xf32>
    %c0_61 = arith.constant 0 : index
    %c0_62 = arith.constant 0 : index
    %c0_63 = arith.constant 0 : index
    %120 = vector.load %arg10[%c0_61, %c0_62, %c0_63] : memref<2x8x32xf32, #tpu.memory_space<vmem>>, vector<2x8x32xf32>
    tpu.vector_store %arg10[%c0_61, %c0_62, %c0_63], %119 {strides = array<i32>} : memref<2x8x32xf32, #tpu.memory_space<vmem>>, vector<2x8x32xf32>,
    return
  }
  func.func @transform_0(%arg0: i32) -> (i32, i32, i32) {
    %c0_i32 = arith.constant 0 : i32
    %c0_i32_0 = arith.constant 0 : i32
    %c0_i32_1 = arith.constant 0 : i32
    %c0_i32_2 = arith.constant 0 : i32
    return %c0_i32, %c0_i32_0, %c0_i32_1 : i32, i32, i32
  }
  func.func @transform_1(%arg0: i32) -> (i32, i32, i32) {
    %c0_i32 = arith.constant 0 : i32
    %c0_i32_0 = arith.constant 0 : i32
    %c0_i32_1 = arith.constant 0 : i32
    %c0_i32_2 = arith.constant 0 : i32
    return %c0_i32, %c0_i32_0, %c0_i32_1 : i32, i32, i32
  }
  func.func @transform_2(%arg0: i32) -> (i32, i32, i32) {
    %c0_i32 = arith.constant 0 : i32
    %c0_i32_0 = arith.constant 0 : i32
    %c0_i32_1 = arith.constant 0 : i32
    %c0_i32_2 = arith.constant 0 : i32
    return %c0_i32, %c0_i32_0, %c0_i32_1 : i32, i32, i32
  }
  func.func @transform_3(%arg0: i32) -> (i32, i32, i32) {
    %c0_i32 = arith.constant 0 : i32
    %c0_i32_0 = arith.constant 0 : i32
    %c0_i32_1 = arith.constant 0 : i32
    %c0_i32_2 = arith.constant 0 : i32
    return %c0_i32, %c0_i32_0, %c0_i32_1 : i32, i32, i32
  }
  func.func @transform_4(%arg0: i32) -> (i32, i32, i32) {
    %c0_i32 = arith.constant 0 : i32
    %c0_i32_0 = arith.constant 0 : i32
    %c0_i32_1 = arith.constant 0 : i32
    %c0_i32_2 = arith.constant 0 : i32
    return %c0_i32, %c0_i32_0, %c0_i32_1 : i32, i32, i32
  }
  func.func @transform_5(%arg0: i32) -> (i32, i32, i32) {
    %c0_i32 = arith.constant 0 : i32
    %c0_i32_0 = arith.constant 0 : i32
    %c0_i32_1 = arith.constant 0 : i32
    %c0_i32_2 = arith.constant 0 : i32
    return %c0_i32, %c0_i32_0, %c0_i32_1 : i32, i32, i32
  }
  func.func @transform_6(%arg0: i32) -> (i32, i32) {
    %c0_i32 = arith.constant 0 : i32
    %c0_i32_0 = arith.constant 0 : i32
    %c0_i32_1 = arith.constant 0 : i32
    return %c0_i32, %c0_i32_0 : i32, i32
  }
  func.func @transform_7(%arg0: i32) -> (i32, i32) {
    %c0_i32 = arith.constant 0 : i32
    %c0_i32_0 = arith.constant 0 : i32
    %c0_i32_1 = arith.constant 0 : i32
    return %c0_i32, %c0_i32_0 : i32, i32
  }
  func.func @transform_8(%arg0: i32) -> (i32, i32, i32) {
    %c0_i32 = arith.constant 0 : i32
    %c0_i32_0 = arith.constant 0 : i32
    %c0_i32_1 = arith.constant 0 : i32
    %c0_i32_2 = arith.constant 0 : i32
    return %c0_i32, %c0_i32_0, %c0_i32_1 : i32, i32, i32
  }
  func.func @transform_9(%arg0: i32) -> (i32, i32, i32) {
    %c0_i32 = arith.constant 0 : i32
    %c0_i32_0 = arith.constant 0 : i32
    %c0_i32_1 = arith.constant 0 : i32
    %c0_i32_2 = arith.constant 0 : i32
    return %c0_i32, %c0_i32_0, %c0_i32_1 : i32, i32, i32
  }
}

</mosaic_0001>

<llo_original>
// kernel: tpu_custom_call.1
$region0: #{tpu_custom_call.1}
  #allocation0 [shape = 'u32[]', space=smem, size = 0x4, offset = 0x4, fixed_abs, tag = 'smem constant byte address 0x4 - core index']
  #allocation1 [shape = 'u32[144,128]{1,0:T(1,128)}', space=vmem, size = 0x12000, scoped, tag = 'internal scratch']
  %s0 = inlined_call_operand.hbm [shape: f32[2,8,32], index: 0, kind: input, shape index: {}]
  %s1 = inlined_call_operand.hbm [shape: f32[2,8,32], index: 1, kind: input, shape index: {}]
  %s2 = inlined_call_operand.hbm [shape: f32[2,8,32], index: 2, kind: input, shape index: {}]
  %s3 = inlined_call_operand.vmem [shape: s32[2,1,8], index: 3, kind: input, shape index: {}]
  %s4 = inlined_call_operand.hbm [shape: f32[3,32,32], index: 4, kind: input, shape index: {}]
  %s5 = inlined_call_operand.vmem [shape: f32[3,1,32], index: 5, kind: input, shape index: {}]
  %s6 = inlined_call_operand.hbm [shape: f32[32,32], index: 6, kind: input, shape index: {}]
  %s7 = inlined_call_operand.vmem [shape: f32[1,32], index: 7, kind: input, shape index: {}]
  %s8 = inlined_call_operand.hbm [shape: f32[2,8,32], index: 8, kind: output, shape index: {0}]
  %s9 = inlined_call_operand.hbm [shape: f32[2,8,32], index: 9, kind: output, shape index: {1}]
  %10 = xla_tuple %s8, %s9
  %s11 = sld [smem:[#allocation0]]
  $region70: #{tpu_custom_call.1} parent=0
    _
  %s13 = ssub.s32 1, %s11
  %s14 = scalar_select 0, %s13, %s11
  $region1: #{tpu_custom_call.1} parent=0
    #allocation2 [shape = 'u8[8192]{0}', space=vmem, size = 0x2000, scoped, tag = 'input window, operand 0, single buffered']
    #allocation3 [shape = 's32[1]{0}', space=sflag, size = 0x4, scoped, tag = 'scoped memory for tpu_custom_call.1']
    #allocation4 [shape = 's32[1]{0}', space=sflag, size = 0x4, scoped, tag = 'scoped memory for tpu_custom_call.1']
    #allocation5 [shape = 'u8[8192]{0}', space=vmem, size = 0x2000, scoped, tag = 'input window, operand 1, single buffered']
    #allocation6 [shape = 's32[1]{0}', space=sflag, size = 0x4, scoped, tag = 'scoped memory for tpu_custom_call.1']
    #allocation7 [shape = 'u8[8192]{0}', space=vmem, size = 0x2000, scoped, tag = 'input window, operand 2, single buffered']
    #allocation8 [shape = 'u8[49152]{0}', space=vmem, size = 0xc000, scoped, tag = 'input window, operand 4, single buffered']
    #allocation9 [shape = 's32[1]{0}', space=sflag, size = 0x4, scoped, tag = 'scoped memory for tpu_custom_call.1']
    #allocation10 [shape = 'u8[16384]{0}', space=vmem, size = 0x4000, scoped, tag = 'input window, operand 6, single buffered']
    #allocation11 [shape = 'u8[8192]{0}', space=vmem, size = 0x2000, scoped, tag = 'output window, operand 0, single buffered']
    #allocation12 [shape = 'u8[8192]{0}', space=vmem, size = 0x2000, scoped, tag = 'output window, operand 1, single buffered']
    #allocation13 [shape = 's32[1]{0}', space=sflag, size = 0x4, scoped, tag = 'scoped memory for tpu_custom_call.1']
    %15 = vsyncpa [#allocation3], 0
    %16 = vsyncpa [#allocation6], 0
    %17 = vsyncpa [#allocation9], 0
    %18 = vsyncpa [#allocation4], 0
    %19 = vsyncpa [#allocation13], 0
    // Predicated region
    $region2: #{tpu_custom_call.1} parent=1 // pred_check
      _
    $region3: #{tpu_custom_call.1} parent=1 // pred_check_branch
      %21 = sbr.rel (0) target = $region5
    $region4: #{tpu_custom_call.1} parent=1 // pred_region
      %s23 = ssub.s32 256, 256
      %24 = vsyncadd [#allocation3], %s23
      %s25 = sshll.u32 [#allocation2], 4
      %s26 = int_to_ptr.vmem [resolvable:$true] %s25
      %31 = dma.hbm_to_vmem [thread:$0]  %s0, 256, %s26, [#allocation3], 128, 128, 8
    $region5: #{tpu_custom_call.1} parent=1 // pred_fallthru
      _
    // Predicated region
    $region6: #{tpu_custom_call.1} parent=1 // pred_check
      _
    $region7: #{tpu_custom_call.1} parent=1 // pred_check_branch
      %33 = sbr.rel (0) target = $region9
    $region8: #{tpu_custom_call.1} parent=1 // pred_region
      %s35 = ssub.s32 256, 256
      %36 = vsyncadd [#allocation6], %s35
      %s37 = sshll.u32 [#allocation5], 4
      %s38 = int_to_ptr.vmem [resolvable:$true] %s37
      %43 = dma.hbm_to_vmem [thread:$0]  %s1, 256, %s38, [#allocation6], 128, 128, 8
    $region9: #{tpu_custom_call.1} parent=1 // pred_fallthru
      _
    // Predicated region
    $region10: #{tpu_custom_call.1} parent=1 // pred_check
      _
    $region11: #{tpu_custom_call.1} parent=1 // pred_check_branch
      %45 = sbr.rel (0) target = $region13
    $region12: #{tpu_custom_call.1} parent=1 // pred_region
      %s47 = ssub.s32 256, 256
      %48 = vsyncadd [#allocation6], %s47
      %s49 = sshll.u32 [#allocation7], 4
      %s50 = int_to_ptr.vmem [resolvable:$true] %s49
      %55 = dma.hbm_to_vmem [thread:$0]  %s2, 256, %s50, [#allocation6], 128, 128, 8
    $region13: #{tpu_custom_call.1} parent=1 // pred_fallthru
      _
    // Predicated region
    $region14: #{tpu_custom_call.1} parent=1 // pred_check
      _
    $region15: #{tpu_custom_call.1} parent=1 // pred_check_branch
      %57 = sbr.rel (0) target = $region17
    $region16: #{tpu_custom_call.1} parent=1 // pred_region
      _
    $region17: #{tpu_custom_call.1} parent=1 // pred_fallthru
      _
    // Predicated region
    $region18: #{tpu_custom_call.1} parent=1 // pred_check
      _
    $region19: #{tpu_custom_call.1} parent=1 // pred_check_branch
      %59 = sbr.rel (0) target = $region21
    $region20: #{tpu_custom_call.1} parent=1 // pred_region
      %s61 = ssub.s32 1536, 1536
      %62 = vsyncadd [#allocation9], %s61
      %s63 = sshll.u32 [#allocation8], 4
      %s64 = int_to_ptr.vmem [resolvable:$true] %s63
      %69 = dma.hbm_to_vmem [thread:$0]  %s4, 1536, %s64, [#allocation9], 128, 128, 8
    $region21: #{tpu_custom_call.1} parent=1 // pred_fallthru
      _
    // Predicated region
    $region22: #{tpu_custom_call.1} parent=1 // pred_check
      _
    $region23: #{tpu_custom_call.1} parent=1 // pred_check_branch
      %71 = sbr.rel (0) target = $region25
    $region24: #{tpu_custom_call.1} parent=1 // pred_region
      _
    $region25: #{tpu_custom_call.1} parent=1 // pred_fallthru
      _
    // Predicated region
    $region26: #{tpu_custom_call.1} parent=1 // pred_check
      _
    $region27: #{tpu_custom_call.1} parent=1 // pred_check_branch
      %73 = sbr.rel (0) target = $region29
    $region28: #{tpu_custom_call.1} parent=1 // pred_region
      %s75 = ssub.s32 512, 512
      %76 = vsyncadd [#allocation9], %s75
      %s77 = sshll.u32 [#allocation10], 4
      %s78 = int_to_ptr.vmem [resolvable:$true] %s77
      %83 = dma.hbm_to_vmem [thread:$0]  %s6, 512, %s78, [#allocation9], 128, 128, 8
    $region29: #{tpu_custom_call.1} parent=1 // pred_fallthru
      _
    // Predicated region
    $region30: #{tpu_custom_call.1} parent=1 // pred_check
      _
    $region31: #{tpu_custom_call.1} parent=1 // pred_check_branch
      %85 = sbr.rel (0) target = $region33
    $region32: #{tpu_custom_call.1} parent=1 // pred_region
      _
    $region33: #{tpu_custom_call.1} parent=1 // pred_fallthru
      _
    // Predicated region
    $region34: #{tpu_custom_call.1} parent=1 // pred_check
      _
    $region35: #{tpu_custom_call.1} parent=1 // pred_check_branch
      %87 = sbr.rel (0) target = $region37
    $region36: #{tpu_custom_call.1} parent=1 // pred_region
      %88 = dma.done [#allocation3], 256
    $region37: #{tpu_custom_call.1} parent=1 // pred_fallthru
      _
    // Predicated region
    $region38: #{tpu_custom_call.1} parent=1 // pred_check
      _
    $region39: #{tpu_custom_call.1} parent=1 // pred_check_branch
      %90 = sbr.rel (0) target = $region41
    $region40: #{tpu_custom_call.1} parent=1 // pred_region
      %91 = dma.done [#allocation6], 256
    $region41: #{tpu_custom_call.1} parent=1 // pred_fallthru
      _
    // Predicated region
    $region42: #{tpu_custom_call.1} parent=1 // pred_check
      _
    $region43: #{tpu_custom_call.1} parent=1 // pred_check_branch
      %93 = sbr.rel (0) target = $region45
    $region44: #{tpu_custom_call.1} parent=1 // pred_region
      %94 = dma.done [#allocation6], 256
    $region45: #{tpu_custom_call.1} parent=1 // pred_fallthru
      _
    // Predicated region
    $region46: #{tpu_custom_call.1} parent=1 // pred_check
      _
    $region47: #{tpu_custom_call.1} parent=1 // pred_check_branch
      %96 = sbr.rel (0) target = $region49
    $region48: #{tpu_custom_call.1} parent=1 // pred_region
      %97 = dma.done [#allocation9], 1536
    $region49: #{tpu_custom_call.1} parent=1 // pred_fallthru
      _
    // Predicated region
    $region50: #{tpu_custom_call.1} parent=1 // pred_check
      _
    $region51: #{tpu_custom_call.1} parent=1 // pred_check_branch
      %99 = sbr.rel (0) target = $region53
    $region52: #{tpu_custom_call.1} parent=1 // pred_region
      %100 = dma.done [#allocation9], 512
    $region53: #{tpu_custom_call.1} parent=1 // pred_fallthru
      _
    %v101 = vld [vmem:[#allocation2] sm:$0xff]
    %v102 = vld [vmem:[#allocation2 + $0x8] sm:$0xff]
    %v103 = vld [vmem:[#allocation5] sm:$0xff]
    %v104 = vld [vmem:[#allocation5 + $0x8] sm:$0xff]
    %v105 = vld [vmem:[#allocation7] sm:$0xff]
    %v106 = vld [vmem:[#allocation7 + $0x8] sm:$0xff]
    %v107 = vld [vmem:[#allocation8] sm:$0xff]
    %v108 = vld [vmem:[#allocation8 + $0x8] sm:$0xff]
    %v109 = vld [vmem:[#allocation8 + $0x10] sm:$0xff]
    %v110 = vld [vmem:[#allocation8 + $0x18] sm:$0xff]
    %v111 = vld [vmem:[%s5] sm:$0x1]
    %v113 = vlaneseq
    %v114 = vshrl.u32 %v113, 7
    %v115 = vsub.s32 0, %v114
    %v116 = vrot.slane %v111, %v115
    %vm118 = vcmask 261120
    %v120 = vsel %vm118, %v101, 0
    %v123 = vsel %vm118, %v102, 0
    %125 = vmatprep.subr.mxu0 0.0
    %126 = vmatpush1.msra.mxu0 %v107
    %127 = vmatprep.subr.mxu0 0.0
    %128 = vmatpush1.msra.mxu0 %v108
    %129 = vmatprep.subr.mxu0 0.0
    %130 = vmatpush1.msra.mxu0 %v109
    %131 = vmatprep.subr.mxu0 0.0
    %132 = vmatpush1.msra.mxu0 %v110
    %133 = vmatprep.subr.mxu0 0.0
    %134 = vmatpush1.msra.mxu0 0.0
    %135 = vmatprep.subr.mxu0 0.0
    %136 = vmatpush1.msra.mxu0 0.0
    %137 = vmatprep.subr.mxu0 0.0
    %138 = vmatpush1.msra.mxu0 0.0
    %139 = vmatprep.subr.mxu0 0.0
    %140 = vmatpush1.msra.mxu0 0.0
    %141 = vmatprep.subr.mxu0 0.0
    %142 = vmatpush1.msra.mxu0 0.0
    %143 = vmatprep.subr.mxu0 0.0
    %144 = vmatpush1.msra.mxu0 0.0
    %145 = vmatprep.subr.mxu0 0.0
    %146 = vmatpush1.msra.mxu0 0.0
    %147 = vmatprep.subr.mxu0 0.0
    %148 = vmatpush1.msra.mxu0 0.0
    %149 = vmatprep.subr.mxu0 0.0
    %150 = vmatpush1.msra.mxu0 0.0
    %151 = vmatprep.subr.mxu0 0.0
    %152 = vmatpush1.msra.mxu0 0.0
    %153 = vmatprep.subr.mxu0 0.0
    %154 = vmatpush1.msra.mxu0 0.0
    %155 = vmatprep.subr.mxu0 0.0
    %156 = vmatpush1.msra.mxu0 0.0
    %157 = vmatprep.subr.mxu0 0.0
    %158 = vmatpush1.msra.mxu0 0.0
    %159 = vmatprep.subr.mxu0 0.0
    %160 = vmatpush1.msra.mxu0 0.0
    %161 = vmatprep.subr.mxu0 0.0
    %162 = vmatpush1.msra.mxu0 0.0
    %163 = vmatprep.subr.mxu0 0.0
    %164 = vmatpush1.msra.mxu0 0.0
    %165 = vmatprep.subr.mxu0 0.0
    %166 = vmatpush1.msra.mxu0 0.0
    %167 = vmatprep.subr.mxu0 0.0
    %168 = vmatpush1.msra.mxu0 0.0
    %169 = vmatprep.subr.mxu0 0.0
    %170 = vmatpush1.msra.mxu0 0.0
    %171 = vmatprep.subr.mxu0 0.0
    %172 = vmatpush1.msra.mxu0 0.0
    %173 = vmatprep.subr.mxu0 0.0
    %174 = vmatpush1.msra.mxu0 0.0
    %175 = vmatprep.subr.mxu0 0.0
    %176 = vmatpush1.msra.mxu0 0.0
    %177 = vmatprep.subr.mxu0 0.0
    %178 = vmatpush1.msra.mxu0 0.0
    %179 = vmatprep.subr.mxu0 0.0
    %180 = vmatpush1.msra.mxu0 0.0
    %181 = vmatprep.subr.mxu0 0.0
    %182 = vmatpush1.msra.mxu0 0.0
    %183 = vmatprep.subr.mxu0 0.0
    %184 = vmatpush1.msra.mxu0 0.0
    %185 = vmatprep.subr.mxu0 0.0
    %186 = vmatpush1.msra.mxu0 0.0
    %187 = vmatprep.subr.mxu0 0.0
    %188 = vmatpush1.msra.mxu0 0.0
    %189 = vmatprep.mubr.f32.mxu0 0.0
    %190 = vmatmul.mubr.f32.gmra.mrb[0].mxu0 %v120
    %v191 = vpop.f32.mrb[0].mxu0
    %v192 = vadd.f32 %v116, %v191
    %v193 = vpop.f32.mrb[0].mxu0
    %194 = vmatprep.mubr.f32.mxu0 0.0
    %195 = vmatmul.mubr.f32.gmra.mrb[0].mxu0 %v123
    %v196 = vpop.f32.mrb[0].mxu0
    %v197 = vadd.f32 %v116, %v196
    %v198 = vpop.f32.mrb[0].mxu0
    %199 = vdwg.mxu0
    %s200 = scalar_lea.vmem [#allocation8], 32
    %v201 = vld [vmem:[%s200] sm:$0xff]
    %v202 = vld [vmem:[%s200 + $0x8] sm:$0xff]
    %v203 = vld [vmem:[%s200 + $0x10] sm:$0xff]
    %v204 = vld [vmem:[%s200 + $0x18] sm:$0xff]
    %s205 = scalar_lea.vmem %s5, 1
    %v206 = vld [vmem:[%s205] sm:$0x1]
    %v208 = vlaneseq
    %v209 = vshrl.u32 %v208, 7
    %v210 = vsub.s32 0, %v209
    %v211 = vrot.slane %v206, %v210
    %v214 = vsel %vm118, %v103, 0
    %v217 = vsel %vm118, %v104, 0
    %219 = vmatprep.subr.mxu0 0.0
    %220 = vmatpush1.msra.mxu0 %v201
    %221 = vmatprep.subr.mxu0 0.0
    %222 = vmatpush1.msra.mxu0 %v202
    %223 = vmatprep.subr.mxu0 0.0
    %224 = vmatpush1.msra.mxu0 %v203
    %225 = vmatprep.subr.mxu0 0.0
    %226 = vmatpush1.msra.mxu0 %v204
    %227 = vmatprep.subr.mxu0 0.0
    %228 = vmatpush1.msra.mxu0 0.0
    %229 = vmatprep.subr.mxu0 0.0
    %230 = vmatpush1.msra.mxu0 0.0
    %231 = vmatprep.subr.mxu0 0.0
    %232 = vmatpush1.msra.mxu0 0.0
    %233 = vmatprep.subr.mxu0 0.0
    %234 = vmatpush1.msra.mxu0 0.0
    %235 = vmatprep.subr.mxu0 0.0
    %236 = vmatpush1.msra.mxu0 0.0
    %237 = vmatprep.subr.mxu0 0.0
    %238 = vmatpush1.msra.mxu0 0.0
    %239 = vmatprep.subr.mxu0 0.0
    %240 = vmatpush1.msra.mxu0 0.0
    %241 = vmatprep.subr.mxu0 0.0
    %242 = vmatpush1.msra.mxu0 0.0
    %243 = vmatprep.subr.mxu0 0.0
    %244 = vmatpush1.msra.mxu0 0.0
    %245 = vmatprep.subr.mxu0 0.0
    %246 = vmatpush1.msra.mxu0 0.0
    %247 = vmatprep.subr.mxu0 0.0
    %248 = vmatpush1.msra.mxu0 0.0
    %249 = vmatprep.subr.mxu0 0.0
    %250 = vmatpush1.msra.mxu0 0.0
    %251 = vmatprep.subr.mxu0 0.0
    %252 = vmatpush1.msra.mxu0 0.0
    %253 = vmatprep.subr.mxu0 0.0
    %254 = vmatpush1.msra.mxu0 0.0
    %255 = vmatprep.subr.mxu0 0.0
    %256 = vmatpush1.msra.mxu0 0.0
    %257 = vmatprep.subr.mxu0 0.0
    %258 = vmatpush1.msra.mxu0 0.0
    %259 = vmatprep.subr.mxu0 0.0
    %260 = vmatpush1.msra.mxu0 0.0
    %261 = vmatprep.subr.mxu0 0.0
    %262 = vmatpush1.msra.mxu0 0.0
    %263 = vmatprep.subr.mxu0 0.0
    %264 = vmatpush1.msra.mxu0 0.0
    %265 = vmatprep.subr.mxu0 0.0
    %266 = vmatpush1.msra.mxu0 0.0
    %267 = vmatprep.subr.mxu0 0.0
    %268 = vmatpush1.msra.mxu0 0.0
    %269 = vmatprep.subr.mxu0 0.0
    %270 = vmatpush1.msra.mxu0 0.0
    %271 = vmatprep.subr.mxu0 0.0
    %272 = vmatpush1.msra.mxu0 0.0
    %273 = vmatprep.subr.mxu0 0.0
    %274 = vmatpush1.msra.mxu0 0.0
    %275 = vmatprep.subr.mxu0 0.0
    %276 = vmatpush1.msra.mxu0 0.0
    %277 = vmatprep.subr.mxu0 0.0
    %278 = vmatpush1.msra.mxu0 0.0
    %279 = vmatprep.subr.mxu0 0.0
    %280 = vmatpush1.msra.mxu0 0.0
    %281 = vmatprep.subr.mxu0 0.0
    %282 = vmatpush1.msra.mxu0 0.0
    %283 = vmatprep.mubr.f32.mxu0 0.0
    %284 = vmatmul.mubr.f32.gmra.mrb[0].mxu0 %v214
    %v285 = vpop.f32.mrb[0].mxu0
    %v286 = vadd.f32 %v211, %v285
    %v287 = vpop.f32.mrb[0].mxu0
    %288 = vmatprep.mubr.f32.mxu0 0.0
    %289 = vmatmul.mubr.f32.gmra.mrb[0].mxu0 %v217
    %v290 = vpop.f32.mrb[0].mxu0
    %v291 = vadd.f32 %v211, %v290
    %v292 = vpop.f32.mrb[0].mxu0
    %293 = vdwg.mxu0
    %s294 = scalar_lea.vmem [#allocation8], 64
    %v295 = vld [vmem:[%s294] sm:$0xff]
    %v296 = vld [vmem:[%s294 + $0x8] sm:$0xff]
    %v297 = vld [vmem:[%s294 + $0x10] sm:$0xff]
    %v298 = vld [vmem:[%s294 + $0x18] sm:$0xff]
    %s299 = scalar_lea.vmem %s5, 2
    %v300 = vld [vmem:[%s299] sm:$0x1]
    %v302 = vlaneseq
    %v303 = vshrl.u32 %v302, 7
    %v304 = vsub.s32 0, %v303
    %v305 = vrot.slane %v300, %v304
    %v308 = vsel %vm118, %v105, 0
    %v311 = vsel %vm118, %v106, 0
    %313 = vmatprep.subr.mxu0 0.0
    %314 = vmatpush1.msra.mxu0 %v295
    %315 = vmatprep.subr.mxu0 0.0
    %316 = vmatpush1.msra.mxu0 %v296
    %317 = vmatprep.subr.mxu0 0.0
    %318 = vmatpush1.msra.mxu0 %v297
    %319 = vmatprep.subr.mxu0 0.0
    %320 = vmatpush1.msra.mxu0 %v298
    %321 = vmatprep.subr.mxu0 0.0
    %322 = vmatpush1.msra.mxu0 0.0
    %323 = vmatprep.subr.mxu0 0.0
    %324 = vmatpush1.msra.mxu0 0.0
    %325 = vmatprep.subr.mxu0 0.0
    %326 = vmatpush1.msra.mxu0 0.0
    %327 = vmatprep.subr.mxu0 0.0
    %328 = vmatpush1.msra.mxu0 0.0
    %329 = vmatprep.subr.mxu0 0.0
    %330 = vmatpush1.msra.mxu0 0.0
    %331 = vmatprep.subr.mxu0 0.0
    %332 = vmatpush1.msra.mxu0 0.0
    %333 = vmatprep.subr.mxu0 0.0
    %334 = vmatpush1.msra.mxu0 0.0
    %335 = vmatprep.subr.mxu0 0.0
    %336 = vmatpush1.msra.mxu0 0.0
    %337 = vmatprep.subr.mxu0 0.0
    %338 = vmatpush1.msra.mxu0 0.0
    %339 = vmatprep.subr.mxu0 0.0
    %340 = vmatpush1.msra.mxu0 0.0
    %341 = vmatprep.subr.mxu0 0.0
    %342 = vmatpush1.msra.mxu0 0.0
    %343 = vmatprep.subr.mxu0 0.0
    %344 = vmatpush1.msra.mxu0 0.0
    %345 = vmatprep.subr.mxu0 0.0
    %346 = vmatpush1.msra.mxu0 0.0
    %347 = vmatprep.subr.mxu0 0.0
    %348 = vmatpush1.msra.mxu0 0.0
    %349 = vmatprep.subr.mxu0 0.0
    %350 = vmatpush1.msra.mxu0 0.0
    %351 = vmatprep.subr.mxu0 0.0
    %352 = vmatpush1.msra.mxu0 0.0
    %353 = vmatprep.subr.mxu0 0.0
    %354 = vmatpush1.msra.mxu0 0.0
    %355 = vmatprep.subr.mxu0 0.0
    %356 = vmatpush1.msra.mxu0 0.0
    %357 = vmatprep.subr.mxu0 0.0
    %358 = vmatpush1.msra.mxu0 0.0
    %359 = vmatprep.subr.mxu0 0.0
    %360 = vmatpush1.msra.mxu0 0.0
    %361 = vmatprep.subr.mxu0 0.0
    %362 = vmatpush1.msra.mxu0 0.0
    %363 = vmatprep.subr.mxu0 0.0
    %364 = vmatpush1.msra.mxu0 0.0
    %365 = vmatprep.subr.mxu0 0.0
    %366 = vmatpush1.msra.mxu0 0.0
    %367 = vmatprep.subr.mxu0 0.0
    %368 = vmatpush1.msra.mxu0 0.0
    %369 = vmatprep.subr.mxu0 0.0
    %370 = vmatpush1.msra.mxu0 0.0
    %371 = vmatprep.subr.mxu0 0.0
    %372 = vmatpush1.msra.mxu0 0.0
    %373 = vmatprep.subr.mxu0 0.0
    %374 = vmatpush1.msra.mxu0 0.0
    %375 = vmatprep.subr.mxu0 0.0
    %376 = vmatpush1.msra.mxu0 0.0
    %377 = vmatprep.mubr.f32.mxu0 0.0
    %378 = vmatmul.mubr.f32.gmra.mrb[0].mxu0 %v308
    %v379 = vpop.f32.mrb[0].mxu0
    %v380 = vadd.f32 %v305, %v379
    %v381 = vpop.f32.mrb[0].mxu0
    %382 = vmatprep.mubr.f32.mxu0 0.0
    %383 = vmatmul.mubr.f32.gmra.mrb[0].mxu0 %v311
    %v384 = vpop.f32.mrb[0].mxu0
    %v385 = vadd.f32 %v305, %v384
    %v386 = vpop.f32.mrb[0].mxu0
    %387 = vdwg.mxu0
    %v388 = vld [vmem:[%s3] sm:$0x1]
    %v389 = vld [vmem:[%s3 + $0x1] sm:$0x1]
    %vm390 = vcmp.eq.s32.totalorder %v388, 0
    %vm391 = vcmp.eq.s32.totalorder %v389, 0
    %v392 = vsel %vm390, 1, 0
    %v393 = vsel %vm391, 1, 0
    %v394 = vlaneseq
    %v395 = vshrl.u32 %v394, 7
    %v396 = vsub.s32 0, %v395
    %v397 = vrot.slane %v392, %v396
    %v398 = vlaneseq
    %v399 = vshrl.u32 %v398, 7
    %v400 = vsub.s32 0, %v399
    %v401 = vrot.slane %v393, %v400
    %vm402 = vcmp.eq.s32.totalorder %v397, 1
    %vm403 = vcmp.eq.s32.totalorder %v401, 1
    %vm404 = vcmask 64512
    %v406 = vsel %vm404, %v192, 0
    %v409 = vsel %vm404, %v286, 0
    %411 = vmatprep.subr.mxu0 0.0
    %412 = vmatpush1.xpose.msra.mxu0 %v409
    %413 = vmatprep.subr.mxu0 0.0
    %414 = vmatpush1.xpose.msra.mxu0 0.0
    %415 = vmatprep.subr.mxu0 0.0
    %416 = vmatpush1.xpose.msra.mxu0 0.0
    %417 = vmatprep.subr.mxu0 0.0
    %418 = vmatpush1.xpose.msra.mxu0 0.0
    %419 = vmatprep.subr.mxu0 0.0
    %420 = vmatpush1.xpose.msra.mxu0 0.0
    %421 = vmatprep.subr.mxu0 0.0
    %422 = vmatpush1.xpose.msra.mxu0 0.0
    %423 = vmatprep.subr.mxu0 0.0
    %424 = vmatpush1.xpose.msra.mxu0 0.0
    %425 = vmatprep.subr.mxu0 0.0
    %426 = vmatpush1.xpose.msra.mxu0 0.0
    %427 = vmatprep.subr.mxu0 0.0
    %428 = vmatpush1.xpose.msra.mxu0 0.0
    %429 = vmatprep.subr.mxu0 0.0
    %430 = vmatpush1.xpose.msra.mxu0 0.0
    %431 = vmatprep.subr.mxu0 0.0
    %432 = vmatpush1.xpose.msra.mxu0 0.0
    %433 = vmatprep.subr.mxu0 0.0
    %434 = vmatpush1.xpose.msra.mxu0 0.0
    %435 = vmatprep.subr.mxu0 0.0
    %436 = vmatpush1.xpose.msra.mxu0 0.0
    %437 = vmatprep.subr.mxu0 0.0
    %438 = vmatpush1.xpose.msra.mxu0 0.0
    %439 = vmatprep.subr.mxu0 0.0
    %440 = vmatpush1.xpose.msra.mxu0 0.0
    %441 = vmatprep.subr.mxu0 0.0
    %442 = vmatpush1.xpose.msra.mxu0 0.0
    %443 = vmatprep.subr.mxu0 0.0
    %444 = vmatpush1.xpose.msra.mxu0 0.0
    %445 = vmatprep.subr.mxu0 0.0
    %446 = vmatpush1.xpose.msra.mxu0 0.0
    %447 = vmatprep.subr.mxu0 0.0
    %448 = vmatpush1.xpose.msra.mxu0 0.0
    %449 = vmatprep.subr.mxu0 0.0
    %450 = vmatpush1.xpose.msra.mxu0 0.0
    %451 = vmatprep.subr.mxu0 0.0
    %452 = vmatpush1.xpose.msra.mxu0 0.0
    %453 = vmatprep.subr.mxu0 0.0
    %454 = vmatpush1.xpose.msra.mxu0 0.0
    %455 = vmatprep.subr.mxu0 0.0
    %456 = vmatpush1.xpose.msra.mxu0 0.0
    %457 = vmatprep.subr.mxu0 0.0
    %458 = vmatpush1.xpose.msra.mxu0 0.0
    %459 = vmatprep.subr.mxu0 0.0
    %460 = vmatpush1.xpose.msra.mxu0 0.0
    %461 = vmatprep.subr.mxu0 0.0
    %462 = vmatpush1.xpose.msra.mxu0 0.0
    %463 = vmatprep.subr.mxu0 0.0
    %464 = vmatpush1.xpose.msra.mxu0 0.0
    %465 = vmatprep.subr.mxu0 0.0
    %466 = vmatpush1.xpose.msra.mxu0 0.0
    %467 = vmatprep.subr.mxu0 0.0
    %468 = vmatpush1.xpose.msra.mxu0 0.0
    %469 = vmatprep.subr.mxu0 0.0
    %470 = vmatpush1.xpose.msra.mxu0 0.0
    %471 = vmatprep.subr.mxu0 0.0
    %472 = vmatpush1.xpose.msra.mxu0 0.0
    %473 = vmatprep.subr.mxu0 0.0
    %474 = vmatpush1.xpose.msra.mxu0 0.0
    %475 = vmatprep.mubr.f32.mxu0 0.0
    %476 = vmatmul.mubr.f32.gmra.mrb[0].mxu0 %v406
    %v477 = vpop.f32.mrb[0].mxu0
    %v478 = vadd.f32 0.0, %v477
    %v479 = vpop.f32.mrb[0].mxu0
    %480 = vdwg.mxu0
    %v482 = vsel %vm404, %v197, 0
    %v485 = vsel %vm404, %v291, 0
    %487 = vmatprep.subr.mxu0 0.0
    %488 = vmatpush1.xpose.msra.mxu0 %v485
    %489 = vmatprep.subr.mxu0 0.0
    %490 = vmatpush1.xpose.msra.mxu0 0.0
    %491 = vmatprep.subr.mxu0 0.0
    %492 = vmatpush1.xpose.msra.mxu0 0.0
    %493 = vmatprep.subr.mxu0 0.0
    %494 = vmatpush1.xpose.msra.mxu0 0.0
    %495 = vmatprep.subr.mxu0 0.0
    %496 = vmatpush1.xpose.msra.mxu0 0.0
    %497 = vmatprep.subr.mxu0 0.0
    %498 = vmatpush1.xpose.msra.mxu0 0.0
    %499 = vmatprep.subr.mxu0 0.0
    %500 = vmatpush1.xpose.msra.mxu0 0.0
    %501 = vmatprep.subr.mxu0 0.0
    %502 = vmatpush1.xpose.msra.mxu0 0.0
    %503 = vmatprep.subr.mxu0 0.0
    %504 = vmatpush1.xpose.msra.mxu0 0.0
    %505 = vmatprep.subr.mxu0 0.0
    %506 = vmatpush1.xpose.msra.mxu0 0.0
    %507 = vmatprep.subr.mxu0 0.0
    %508 = vmatpush1.xpose.msra.mxu0 0.0
    %509 = vmatprep.subr.mxu0 0.0
    %510 = vmatpush1.xpose.msra.mxu0 0.0
    %511 = vmatprep.subr.mxu0 0.0
    %512 = vmatpush1.xpose.msra.mxu0 0.0
    %513 = vmatprep.subr.mxu0 0.0
    %514 = vmatpush1.xpose.msra.mxu0 0.0
    %515 = vmatprep.subr.mxu0 0.0
    %516 = vmatpush1.xpose.msra.mxu0 0.0
    %517 = vmatprep.subr.mxu0 0.0
    %518 = vmatpush1.xpose.msra.mxu0 0.0
    %519 = vmatprep.subr.mxu0 0.0
    %520 = vmatpush1.xpose.msra.mxu0 0.0
    %521 = vmatprep.subr.mxu0 0.0
    %522 = vmatpush1.xpose.msra.mxu0 0.0
    %523 = vmatprep.subr.mxu0 0.0
    %524 = vmatpush1.xpose.msra.mxu0 0.0
    %525 = vmatprep.subr.mxu0 0.0
    %526 = vmatpush1.xpose.msra.mxu0 0.0
    %527 = vmatprep.subr.mxu0 0.0
    %528 = vmatpush1.xpose.msra.mxu0 0.0
    %529 = vmatprep.subr.mxu0 0.0
    %530 = vmatpush1.xpose.msra.mxu0 0.0
    %531 = vmatprep.subr.mxu0 0.0
    %532 = vmatpush1.xpose.msra.mxu0 0.0
    %533 = vmatprep.subr.mxu0 0.0
    %534 = vmatpush1.xpose.msra.mxu0 0.0
    %535 = vmatprep.subr.mxu0 0.0
    %536 = vmatpush1.xpose.msra.mxu0 0.0
    %537 = vmatprep.subr.mxu0 0.0
    %538 = vmatpush1.xpose.msra.mxu0 0.0
    %539 = vmatprep.subr.mxu0 0.0
    %540 = vmatpush1.xpose.msra.mxu0 0.0
    %541 = vmatprep.subr.mxu0 0.0
    %542 = vmatpush1.xpose.msra.mxu0 0.0
    %543 = vmatprep.subr.mxu0 0.0
    %544 = vmatpush1.xpose.msra.mxu0 0.0
    %545 = vmatprep.subr.mxu0 0.0
    %546 = vmatpush1.xpose.msra.mxu0 0.0
    %547 = vmatprep.subr.mxu0 0.0
    %548 = vmatpush1.xpose.msra.mxu0 0.0
    %549 = vmatprep.subr.mxu0 0.0
    %550 = vmatpush1.xpose.msra.mxu0 0.0
    %551 = vmatprep.mubr.f32.mxu0 0.0
    %552 = vmatmul.mubr.f32.gmra.mrb[0].mxu0 %v482
    %v553 = vpop.f32.mrb[0].mxu0
    %v554 = vadd.f32 0.0, %v553
    %v555 = vpop.f32.mrb[0].mxu0
    %556 = vdwg.mxu0
    %v557 = vmul.f32 %v478, 0.35355338
    %v558 = vmul.f32 %v554, 0.35355338
    %v559 = vsel %vm402, -1e+09, %v557
    %v560 = vsel %vm403, -1e+09, %v558
    %v561 = vsel %vm404, %v559, -inf
    %562 = vmax.xlane.f32.xlu0 %v561
    %v563 = vpop.xlane.xlu0 %562
    %v564 = vsel %vm404, %v560, -inf
    %565 = vmax.xlane.f32.xlu0 %v564
    %v566 = vpop.xlane.xlu0 %565
    %v567 = vsub.f32 %v559, %v563
    %v568 = vsub.f32 %v560, %v566
    %v569 = vmul.f32 %v567, 1.442695
    %v570 = vpow.pop %v569
    %v571 = vmul.f32 %v568, 1.442695
    %v572 = vpow.pop %v571
    %v573 = vsel %vm404, %v570, 0.0
    %574 = vadd.xlane.f32.xlu0 %v573
    %v575 = vpop.xlane.xlu0 %574
    %v576 = vsel %vm404, %v572, 0.0
    %577 = vadd.xlane.f32.xlu0 %v576
    %v578 = vpop.xlane.xlu0 %577
    %v579 = vrcp.pop %v575
    %v580 = vmul.f32 %v570, %v579
    %v581 = vrcp.pop %v578
    %v582 = vmul.f32 %v572, %v581
    %v584 = vsel %vm404, %v580, 0
    %586 = vmatprep.subr.mxu0 0.0
    %587 = vmatpush1.msra.mxu0 %v380
    %588 = vmatprep.subr.mxu0 0.0
    %589 = vmatpush1.msra.mxu0 0.0
    %590 = vmatprep.subr.mxu0 0.0
    %591 = vmatpush1.msra.mxu0 0.0
    %592 = vmatprep.subr.mxu0 0.0
    %593 = vmatpush1.msra.mxu0 0.0
    %594 = vmatprep.subr.mxu0 0.0
    %595 = vmatpush1.msra.mxu0 0.0
    %596 = vmatprep.subr.mxu0 0.0
    %597 = vmatpush1.msra.mxu0 0.0
    %598 = vmatprep.subr.mxu0 0.0
    %599 = vmatpush1.msra.mxu0 0.0
    %600 = vmatprep.subr.mxu0 0.0
    %601 = vmatpush1.msra.mxu0 0.0
    %602 = vmatprep.subr.mxu0 0.0
    %603 = vmatpush1.msra.mxu0 0.0
    %604 = vmatprep.subr.mxu0 0.0
    %605 = vmatpush1.msra.mxu0 0.0
    %606 = vmatprep.subr.mxu0 0.0
    %607 = vmatpush1.msra.mxu0 0.0
    %608 = vmatprep.subr.mxu0 0.0
    %609 = vmatpush1.msra.mxu0 0.0
    %610 = vmatprep.subr.mxu0 0.0
    %611 = vmatpush1.msra.mxu0 0.0
    %612 = vmatprep.subr.mxu0 0.0
    %613 = vmatpush1.msra.mxu0 0.0
    %614 = vmatprep.subr.mxu0 0.0
    %615 = vmatpush1.msra.mxu0 0.0
    %616 = vmatprep.subr.mxu0 0.0
    %617 = vmatpush1.msra.mxu0 0.0
    %618 = vmatprep.subr.mxu0 0.0
    %619 = vmatpush1.msra.mxu0 0.0
    %620 = vmatprep.subr.mxu0 0.0
    %621 = vmatpush1.msra.mxu0 0.0
    %622 = vmatprep.subr.mxu0 0.0
    %623 = vmatpush1.msra.mxu0 0.0
    %624 = vmatprep.subr.mxu0 0.0
    %625 = vmatpush1.msra.mxu0 0.0
    %626 = vmatprep.subr.mxu0 0.0
    %627 = vmatpush1.msra.mxu0 0.0
    %628 = vmatprep.subr.mxu0 0.0
    %629 = vmatpush1.msra.mxu0 0.0
    %630 = vmatprep.subr.mxu0 0.0
    %631 = vmatpush1.msra.mxu0 0.0
    %632 = vmatprep.subr.mxu0 0.0
    %633 = vmatpush1.msra.mxu0 0.0
    %634 = vmatprep.subr.mxu0 0.0
    %635 = vmatpush1.msra.mxu0 0.0
    %636 = vmatprep.subr.mxu0 0.0
    %637 = vmatpush1.msra.mxu0 0.0
    %638 = vmatprep.subr.mxu0 0.0
    %639 = vmatpush1.msra.mxu0 0.0
    %640 = vmatprep.subr.mxu0 0.0
    %641 = vmatpush1.msra.mxu0 0.0
    %642 = vmatprep.subr.mxu0 0.0
    %643 = vmatpush1.msra.mxu0 0.0
    %644 = vmatprep.subr.mxu0 0.0
    %645 = vmatpush1.msra.mxu0 0.0
    %646 = vmatprep.subr.mxu0 0.0
    %647 = vmatpush1.msra.mxu0 0.0
    %648 = vmatprep.subr.mxu0 0.0
    %649 = vmatpush1.msra.mxu0 0.0
    %650 = vmatprep.mubr.f32.mxu0 0.0
    %651 = vmatmul.mubr.f32.gmra.mrb[0].mxu0 %v584
    %v652 = vpop.f32.mrb[0].mxu0
    %v653 = vadd.f32 0.0, %v652
    %v654 = vpop.f32.mrb[0].mxu0
    %655 = vdwg.mxu0
    %v657 = vsel %vm404, %v582, 0
    %659 = vmatprep.subr.mxu0 0.0
    %660 = vmatpush1.msra.mxu0 %v385
    %661 = vmatprep.subr.mxu0 0.0
    %662 = vmatpush1.msra.mxu0 0.0
    %663 = vmatprep.subr.mxu0 0.0
    %664 = vmatpush1.msra.mxu0 0.0
    %665 = vmatprep.subr.mxu0 0.0
    %666 = vmatpush1.msra.mxu0 0.0
    %667 = vmatprep.subr.mxu0 0.0
    %668 = vmatpush1.msra.mxu0 0.0
    %669 = vmatprep.subr.mxu0 0.0
    %670 = vmatpush1.msra.mxu0 0.0
    %671 = vmatprep.subr.mxu0 0.0
    %672 = vmatpush1.msra.mxu0 0.0
    %673 = vmatprep.subr.mxu0 0.0
    %674 = vmatpush1.msra.mxu0 0.0
    %675 = vmatprep.subr.mxu0 0.0
    %676 = vmatpush1.msra.mxu0 0.0
    %677 = vmatprep.subr.mxu0 0.0
    %678 = vmatpush1.msra.mxu0 0.0
    %679 = vmatprep.subr.mxu0 0.0
    %680 = vmatpush1.msra.mxu0 0.0
    %681 = vmatprep.subr.mxu0 0.0
    %682 = vmatpush1.msra.mxu0 0.0
    %683 = vmatprep.subr.mxu0 0.0
    %684 = vmatpush1.msra.mxu0 0.0
    %685 = vmatprep.subr.mxu0 0.0
    %686 = vmatpush1.msra.mxu0 0.0
    %687 = vmatprep.subr.mxu0 0.0
    %688 = vmatpush1.msra.mxu0 0.0
    %689 = vmatprep.subr.mxu0 0.0
    %690 = vmatpush1.msra.mxu0 0.0
    %691 = vmatprep.subr.mxu0 0.0
    %692 = vmatpush1.msra.mxu0 0.0
    %693 = vmatprep.subr.mxu0 0.0
    %694 = vmatpush1.msra.mxu0 0.0
    %695 = vmatprep.subr.mxu0 0.0
    %696 = vmatpush1.msra.mxu0 0.0
    %697 = vmatprep.subr.mxu0 0.0
    %698 = vmatpush1.msra.mxu0 0.0
    %699 = vmatprep.subr.mxu0 0.0
    %700 = vmatpush1.msra.mxu0 0.0
    %701 = vmatprep.subr.mxu0 0.0
    %702 = vmatpush1.msra.mxu0 0.0
    %703 = vmatprep.subr.mxu0 0.0
    %704 = vmatpush1.msra.mxu0 0.0
    %705 = vmatprep.subr.mxu0 0.0
    %706 = vmatpush1.msra.mxu0 0.0
    %707 = vmatprep.subr.mxu0 0.0
    %708 = vmatpush1.msra.mxu0 0.0
    %709 = vmatprep.subr.mxu0 0.0
    %710 = vmatpush1.msra.mxu0 0.0
    %711 = vmatprep.subr.mxu0 0.0
    %712 = vmatpush1.msra.mxu0 0.0
    %713 = vmatprep.subr.mxu0 0.0
    %714 = vmatpush1.msra.mxu0 0.0
    %715 = vmatprep.subr.mxu0 0.0
    %716 = vmatpush1.msra.mxu0 0.0
    %717 = vmatprep.subr.mxu0 0.0
    %718 = vmatpush1.msra.mxu0 0.0
    %719 = vmatprep.subr.mxu0 0.0
    %720 = vmatpush1.msra.mxu0 0.0
    %721 = vmatprep.subr.mxu0 0.0
    %722 = vmatpush1.msra.mxu0 0.0
    %723 = vmatprep.mubr.f32.mxu0 0.0
    %724 = vmatmul.mubr.f32.gmra.mrb[0].mxu0 %v657
    %v725 = vpop.f32.mrb[0].mxu0
    %v726 = vadd.f32 0.0, %v725
    %v727 = vpop.f32.mrb[0].mxu0
    %728 = vdwg.mxu0
    %729 = vrot.lane.b32.xlu0 %v192, 120
    %v730 = vpop.permute.xlu0 %729
    %731 = vrot.lane.b32.xlu0 %v286, 120
    %v732 = vpop.permute.xlu0 %731
    %v733 = vsel %vm404, %v730, 0
    %v735 = vsel %vm404, %v732, 0
    %737 = vmatprep.subr.mxu0 0.0
    %738 = vmatpush1.xpose.msra.mxu0 %v735
    %739 = vmatprep.subr.mxu0 0.0
    %740 = vmatpush1.xpose.msra.mxu0 0.0
    %741 = vmatprep.subr.mxu0 0.0
    %742 = vmatpush1.xpose.msra.mxu0 0.0
    %743 = vmatprep.subr.mxu0 0.0
    %744 = vmatpush1.xpose.msra.mxu0 0.0
    %745 = vmatprep.subr.mxu0 0.0
    %746 = vmatpush1.xpose.msra.mxu0 0.0
    %747 = vmatprep.subr.mxu0 0.0
    %748 = vmatpush1.xpose.msra.mxu0 0.0
    %749 = vmatprep.subr.mxu0 0.0
    %750 = vmatpush1.xpose.msra.mxu0 0.0
    %751 = vmatprep.subr.mxu0 0.0
    %752 = vmatpush1.xpose.msra.mxu0 0.0
    %753 = vmatprep.subr.mxu0 0.0
    %754 = vmatpush1.xpose.msra.mxu0 0.0
    %755 = vmatprep.subr.mxu0 0.0
    %756 = vmatpush1.xpose.msra.mxu0 0.0
    %757 = vmatprep.subr.mxu0 0.0
    %758 = vmatpush1.xpose.msra.mxu0 0.0
    %759 = vmatprep.subr.mxu0 0.0
    %760 = vmatpush1.xpose.msra.mxu0 0.0
    %761 = vmatprep.subr.mxu0 0.0
    %762 = vmatpush1.xpose.msra.mxu0 0.0
    %763 = vmatprep.subr.mxu0 0.0
    %764 = vmatpush1.xpose.msra.mxu0 0.0
    %765 = vmatprep.subr.mxu0 0.0
    %766 = vmatpush1.xpose.msra.mxu0 0.0
    %767 = vmatprep.subr.mxu0 0.0
    %768 = vmatpush1.xpose.msra.mxu0 0.0
    %769 = vmatprep.subr.mxu0 0.0
    %770 = vmatpush1.xpose.msra.mxu0 0.0
    %771 = vmatprep.subr.mxu0 0.0
    %772 = vmatpush1.xpose.msra.mxu0 0.0
    %773 = vmatprep.subr.mxu0 0.0
    %774 = vmatpush1.xpose.msra.mxu0 0.0
    %775 = vmatprep.subr.mxu0 0.0
    %776 = vmatpush1.xpose.msra.mxu0 0.0
    %777 = vmatprep.subr.mxu0 0.0
    %778 = vmatpush1.xpose.msra.mxu0 0.0
    %779 = vmatprep.subr.mxu0 0.0
    %780 = vmatpush1.xpose.msra.mxu0 0.0
    %781 = vmatprep.subr.mxu0 0.0
    %782 = vmatpush1.xpose.msra.mxu0 0.0
    %783 = vmatprep.subr.mxu0 0.0
    %784 = vmatpush1.xpose.msra.mxu0 0.0
    %785 = vmatprep.subr.mxu0 0.0
    %786 = vmatpush1.xpose.msra.mxu0 0.0
    %787 = vmatprep.subr.mxu0 0.0
    %788 = vmatpush1.xpose.msra.mxu0 0.0
    %789 = vmatprep.subr.mxu0 0.0
    %790 = vmatpush1.xpose.msra.mxu0 0.0
    %791 = vmatprep.subr.mxu0 0.0
    %792 = vmatpush1.xpose.msra.mxu0 0.0
    %793 = vmatprep.subr.mxu0 0.0
    %794 = vmatpush1.xpose.msra.mxu0 0.0
    %795 = vmatprep.subr.mxu0 0.0
    %796 = vmatpush1.xpose.msra.mxu0 0.0
    %797 = vmatprep.subr.mxu0 0.0
    %798 = vmatpush1.xpose.msra.mxu0 0.0
    %799 = vmatprep.subr.mxu0 0.0
    %800 = vmatpush1.xpose.msra.mxu0 0.0
    %801 = vmatprep.mubr.f32.mxu0 0.0
    %802 = vmatmul.mubr.f32.gmra.mrb[0].mxu0 %v733
    %v803 = vpop.f32.mrb[0].mxu0
    %v804 = vadd.f32 0.0, %v803
    %v805 = vpop.f32.mrb[0].mxu0
    %806 = vdwg.mxu0
    %807 = vrot.lane.b32.xlu0 %v197, 120
    %v808 = vpop.permute.xlu0 %807
    %809 = vrot.lane.b32.xlu0 %v291, 120
    %v810 = vpop.permute.xlu0 %809
    %v811 = vsel %vm404, %v808, 0
    %v813 = vsel %vm404, %v810, 0
    %815 = vmatprep.subr.mxu0 0.0
    %816 = vmatpush1.xpose.msra.mxu0 %v813
    %817 = vmatprep.subr.mxu0 0.0
    %818 = vmatpush1.xpose.msra.mxu0 0.0
    %819 = vmatprep.subr.mxu0 0.0
    %820 = vmatpush1.xpose.msra.mxu0 0.0
    %821 = vmatprep.subr.mxu0 0.0
    %822 = vmatpush1.xpose.msra.mxu0 0.0
    %823 = vmatprep.subr.mxu0 0.0
    %824 = vmatpush1.xpose.msra.mxu0 0.0
    %825 = vmatprep.subr.mxu0 0.0
    %826 = vmatpush1.xpose.msra.mxu0 0.0
    %827 = vmatprep.subr.mxu0 0.0
    %828 = vmatpush1.xpose.msra.mxu0 0.0
    %829 = vmatprep.subr.mxu0 0.0
    %830 = vmatpush1.xpose.msra.mxu0 0.0
    %831 = vmatprep.subr.mxu0 0.0
    %832 = vmatpush1.xpose.msra.mxu0 0.0
    %833 = vmatprep.subr.mxu0 0.0
    %834 = vmatpush1.xpose.msra.mxu0 0.0
    %835 = vmatprep.subr.mxu0 0.0
    %836 = vmatpush1.xpose.msra.mxu0 0.0
    %837 = vmatprep.subr.mxu0 0.0
    %838 = vmatpush1.xpose.msra.mxu0 0.0
    %839 = vmatprep.subr.mxu0 0.0
    %840 = vmatpush1.xpose.msra.mxu0 0.0
    %841 = vmatprep.subr.mxu0 0.0
    %842 = vmatpush1.xpose.msra.mxu0 0.0
    %843 = vmatprep.subr.mxu0 0.0
    %844 = vmatpush1.xpose.msra.mxu0 0.0
    %845 = vmatprep.subr.mxu0 0.0
    %846 = vmatpush1.xpose.msra.mxu0 0.0
    %847 = vmatprep.subr.mxu0 0.0
    %848 = vmatpush1.xpose.msra.mxu0 0.0
    %849 = vmatprep.subr.mxu0 0.0
    %850 = vmatpush1.xpose.msra.mxu0 0.0
    %851 = vmatprep.subr.mxu0 0.0
    %852 = vmatpush1.xpose.msra.mxu0 0.0
    %853 = vmatprep.subr.mxu0 0.0
    %854 = vmatpush1.xpose.msra.mxu0 0.0
    %855 = vmatprep.subr.mxu0 0.0
    %856 = vmatpush1.xpose.msra.mxu0 0.0
    %857 = vmatprep.subr.mxu0 0.0
    %858 = vmatpush1.xpose.msra.mxu0 0.0
    %859 = vmatprep.subr.mxu0 0.0
    %860 = vmatpush1.xpose.msra.mxu0 0.0
    %861 = vmatprep.subr.mxu0 0.0
    %862 = vmatpush1.xpose.msra.mxu0 0.0
    %863 = vmatprep.subr.mxu0 0.0
    %864 = vmatpush1.xpose.msra.mxu0 0.0
    %865 = vmatprep.subr.mxu0 0.0
    %866 = vmatpush1.xpose.msra.mxu0 0.0
    %867 = vmatprep.subr.mxu0 0.0
    %868 = vmatpush1.xpose.msra.mxu0 0.0
    %869 = vmatprep.subr.mxu0 0.0
    %870 = vmatpush1.xpose.msra.mxu0 0.0
    %871 = vmatprep.subr.mxu0 0.0
    %872 = vmatpush1.xpose.msra.mxu0 0.0
    %873 = vmatprep.subr.mxu0 0.0
    %874 = vmatpush1.xpose.msra.mxu0 0.0
    %875 = vmatprep.subr.mxu0 0.0
    %876 = vmatpush1.xpose.msra.mxu0 0.0
    %877 = vmatprep.subr.mxu0 0.0
    %878 = vmatpush1.xpose.msra.mxu0 0.0
    %879 = vmatprep.mubr.f32.mxu0 0.0
    %880 = vmatmul.mubr.f32.gmra.mrb[0].mxu0 %v811
    %v881 = vpop.f32.mrb[0].mxu0
    %v882 = vadd.f32 0.0, %v881
    %v883 = vpop.f32.mrb[0].mxu0
    %884 = vdwg.mxu0
    %v885 = vmul.f32 %v804, 0.35355338
    %v886 = vmul.f32 %v882, 0.35355338
    %v887 = vsel %vm402, -1e+09, %v885
    %v888 = vsel %vm403, -1e+09, %v886
    %v889 = vsel %vm404, %v887, -inf
    %890 = vmax.xlane.f32.xlu0 %v889
    %v891 = vpop.xlane.xlu0 %890
    %v892 = vsel %vm404, %v888, -inf
    %893 = vmax.xlane.f32.xlu0 %v892
    %v894 = vpop.xlane.xlu0 %893
    %v895 = vsub.f32 %v887, %v891
    %v896 = vsub.f32 %v888, %v894
    %v897 = vmul.f32 %v895, 1.442695
    %v898 = vpow.pop %v897
    %v899 = vmul.f32 %v896, 1.442695
    %v900 = vpow.pop %v899
    %v901 = vsel %vm404, %v898, 0.0
    %902 = vadd.xlane.f32.xlu0 %v901
    %v903 = vpop.xlane.xlu0 %902
    %v904 = vsel %vm404, %v900, 0.0
    %905 = vadd.xlane.f32.xlu0 %v904
    %v906 = vpop.xlane.xlu0 %905
    %v907 = vrcp.pop %v903
    %v908 = vmul.f32 %v898, %v907
    %v909 = vrcp.pop %v906
    %v910 = vmul.f32 %v900, %v909
    %912 = vrot.lane.b32.xlu0 %v380, 120
    %v913 = vpop.permute.xlu0 %912
    %v916 = vsel %vm404, %v908, 0
    %918 = vmatprep.subr.mxu0 0.0
    %919 = vmatpush1.msra.mxu0 %v913
    %920 = vmatprep.subr.mxu0 0.0
    %921 = vmatpush1.msra.mxu0 0.0
    %922 = vmatprep.subr.mxu0 0.0
    %923 = vmatpush1.msra.mxu0 0.0
    %924 = vmatprep.subr.mxu0 0.0
    %925 = vmatpush1.msra.mxu0 0.0
    %926 = vmatprep.subr.mxu0 0.0
    %927 = vmatpush1.msra.mxu0 0.0
    %928 = vmatprep.subr.mxu0 0.0
    %929 = vmatpush1.msra.mxu0 0.0
    %930 = vmatprep.subr.mxu0 0.0
    %931 = vmatpush1.msra.mxu0 0.0
    %932 = vmatprep.subr.mxu0 0.0
    %933 = vmatpush1.msra.mxu0 0.0
    %934 = vmatprep.subr.mxu0 0.0
    %935 = vmatpush1.msra.mxu0 0.0
    %936 = vmatprep.subr.mxu0 0.0
    %937 = vmatpush1.msra.mxu0 0.0
    %938 = vmatprep.subr.mxu0 0.0
    %939 = vmatpush1.msra.mxu0 0.0
    %940 = vmatprep.subr.mxu0 0.0
    %941 = vmatpush1.msra.mxu0 0.0
    %942 = vmatprep.subr.mxu0 0.0
    %943 = vmatpush1.msra.mxu0 0.0
    %944 = vmatprep.subr.mxu0 0.0
    %945 = vmatpush1.msra.mxu0 0.0
    %946 = vmatprep.subr.mxu0 0.0
    %947 = vmatpush1.msra.mxu0 0.0
    %948 = vmatprep.subr.mxu0 0.0
    %949 = vmatpush1.msra.mxu0 0.0
    %950 = vmatprep.subr.mxu0 0.0
    %951 = vmatpush1.msra.mxu0 0.0
    %952 = vmatprep.subr.mxu0 0.0
    %953 = vmatpush1.msra.mxu0 0.0
    %954 = vmatprep.subr.mxu0 0.0
    %955 = vmatpush1.msra.mxu0 0.0
    %956 = vmatprep.subr.mxu0 0.0
    %957 = vmatpush1.msra.mxu0 0.0
    %958 = vmatprep.subr.mxu0 0.0
    %959 = vmatpush1.msra.mxu0 0.0
    %960 = vmatprep.subr.mxu0 0.0
    %961 = vmatpush1.msra.mxu0 0.0
    %962 = vmatprep.subr.mxu0 0.0
    %963 = vmatpush1.msra.mxu0 0.0
    %964 = vmatprep.subr.mxu0 0.0
    %965 = vmatpush1.msra.mxu0 0.0
    %966 = vmatprep.subr.mxu0 0.0
    %967 = vmatpush1.msra.mxu0 0.0
    %968 = vmatprep.subr.mxu0 0.0
    %969 = vmatpush1.msra.mxu0 0.0
    %970 = vmatprep.subr.mxu0 0.0
    %971 = vmatpush1.msra.mxu0 0.0
    %972 = vmatprep.subr.mxu0 0.0
    %973 = vmatpush1.msra.mxu0 0.0
    %974 = vmatprep.subr.mxu0 0.0
    %975 = vmatpush1.msra.mxu0 0.0
    %976 = vmatprep.subr.mxu0 0.0
    %977 = vmatpush1.msra.mxu0 0.0
    %978 = vmatprep.subr.mxu0 0.0
    %979 = vmatpush1.msra.mxu0 0.0
    %980 = vmatprep.subr.mxu0 0.0
    %981 = vmatpush1.msra.mxu0 0.0
    %982 = vmatprep.mubr.f32.mxu0 0.0
    %983 = vmatmul.mubr.f32.gmra.mrb[0].mxu0 %v916
    %v984 = vpop.f32.mrb[0].mxu0
    %v985 = vadd.f32 0.0, %v984
    %v986 = vpop.f32.mrb[0].mxu0
    %987 = vdwg.mxu0
    %989 = vrot.lane.b32.xlu0 %v385, 120
    %v990 = vpop.permute.xlu0 %989
    %v993 = vsel %vm404, %v910, 0
    %995 = vmatprep.subr.mxu0 0.0
    %996 = vmatpush1.msra.mxu0 %v990
    %997 = vmatprep.subr.mxu0 0.0
    %998 = vmatpush1.msra.mxu0 0.0
    %999 = vmatprep.subr.mxu0 0.0
    %1000 = vmatpush1.msra.mxu0 0.0
    %1001 = vmatprep.subr.mxu0 0.0
    %1002 = vmatpush1.msra.mxu0 0.0
    %1003 = vmatprep.subr.mxu0 0.0
    %1004 = vmatpush1.msra.mxu0 0.0
    %1005 = vmatprep.subr.mxu0 0.0
    %1006 = vmatpush1.msra.mxu0 0.0
    %1007 = vmatprep.subr.mxu0 0.0
    %1008 = vmatpush1.msra.mxu0 0.0
    %1009 = vmatprep.subr.mxu0 0.0
    %1010 = vmatpush1.msra.mxu0 0.0
    %1011 = vmatprep.subr.mxu0 0.0
    %1012 = vmatpush1.msra.mxu0 0.0
    %1013 = vmatprep.subr.mxu0 0.0
    %1014 = vmatpush1.msra.mxu0 0.0
    %1015 = vmatprep.subr.mxu0 0.0
    %1016 = vmatpush1.msra.mxu0 0.0
    %1017 = vmatprep.subr.mxu0 0.0
    %1018 = vmatpush1.msra.mxu0 0.0
    %1019 = vmatprep.subr.mxu0 0.0
    %1020 = vmatpush1.msra.mxu0 0.0
    %1021 = vmatprep.subr.mxu0 0.0
    %1022 = vmatpush1.msra.mxu0 0.0
    %1023 = vmatprep.subr.mxu0 0.0
    %1024 = vmatpush1.msra.mxu0 0.0
    %1025 = vmatprep.subr.mxu0 0.0
    %1026 = vmatpush1.msra.mxu0 0.0
    %1027 = vmatprep.subr.mxu0 0.0
    %1028 = vmatpush1.msra.mxu0 0.0
    %1029 = vmatprep.subr.mxu0 0.0
    %1030 = vmatpush1.msra.mxu0 0.0
    %1031 = vmatprep.subr.mxu0 0.0
    %1032 = vmatpush1.msra.mxu0 0.0
    %1033 = vmatprep.subr.mxu0 0.0
    %1034 = vmatpush1.msra.mxu0 0.0
    %1035 = vmatprep.subr.mxu0 0.0
    %1036 = vmatpush1.msra.mxu0 0.0
    %1037 = vmatprep.subr.mxu0 0.0
    %1038 = vmatpush1.msra.mxu0 0.0
    %1039 = vmatprep.subr.mxu0 0.0
    %1040 = vmatpush1.msra.mxu0 0.0
    %1041 = vmatprep.subr.mxu0 0.0
    %1042 = vmatpush1.msra.mxu0 0.0
    %1043 = vmatprep.subr.mxu0 0.0
    %1044 = vmatpush1.msra.mxu0 0.0
    %1045 = vmatprep.subr.mxu0 0.0
    %1046 = vmatpush1.msra.mxu0 0.0
    %1047 = vmatprep.subr.mxu0 0.0
    %1048 = vmatpush1.msra.mxu0 0.0
    %1049 = vmatprep.subr.mxu0 0.0
    %1050 = vmatpush1.msra.mxu0 0.0
    %1051 = vmatprep.subr.mxu0 0.0
    %1052 = vmatpush1.msra.mxu0 0.0
    %1053 = vmatprep.subr.mxu0 0.0
    %1054 = vmatpush1.msra.mxu0 0.0
    %1055 = vmatprep.subr.mxu0 0.0
    %1056 = vmatpush1.msra.mxu0 0.0
    %1057 = vmatprep.subr.mxu0 0.0
    %1058 = vmatpush1.msra.mxu0 0.0
    %1059 = vmatprep.mubr.f32.mxu0 0.0
    %1060 = vmatmul.mubr.f32.gmra.mrb[0].mxu0 %v993
    %v1061 = vpop.f32.mrb[0].mxu0
    %v1062 = vadd.f32 0.0, %v1061
    %v1063 = vpop.f32.mrb[0].mxu0
    %1064 = vdwg.mxu0
    %1065 = vrot.lane.b32.xlu0 %v192, 112
    %v1066 = vpop.permute.xlu0 %1065
    %1067 = vrot.lane.b32.xlu0 %v286, 112
    %v1068 = vpop.permute.xlu0 %1067
    %v1069 = vsel %vm404, %v1066, 0
    %v1071 = vsel %vm404, %v1068, 0
    %1073 = vmatprep.subr.mxu0 0.0
    %1074 = vmatpush1.xpose.msra.mxu0 %v1071
    %1075 = vmatprep.subr.mxu0 0.0
    %1076 = vmatpush1.xpose.msra.mxu0 0.0
    %1077 = vmatprep.subr.mxu0 0.0
    %1078 = vmatpush1.xpose.msra.mxu0 0.0
    %1079 = vmatprep.subr.mxu0 0.0
    %1080 = vmatpush1.xpose.msra.mxu0 0.0
    %1081 = vmatprep.subr.mxu0 0.0
    %1082 = vmatpush1.xpose.msra.mxu0 0.0
    %1083 = vmatprep.subr.mxu0 0.0
    %1084 = vmatpush1.xpose.msra.mxu0 0.0
    %1085 = vmatprep.subr.mxu0 0.0
    %1086 = vmatpush1.xpose.msra.mxu0 0.0
    %1087 = vmatprep.subr.mxu0 0.0
    %1088 = vmatpush1.xpose.msra.mxu0 0.0
    %1089 = vmatprep.subr.mxu0 0.0
    %1090 = vmatpush1.xpose.msra.mxu0 0.0
    %1091 = vmatprep.subr.mxu0 0.0
    %1092 = vmatpush1.xpose.msra.mxu0 0.0
    %1093 = vmatprep.subr.mxu0 0.0
    %1094 = vmatpush1.xpose.msra.mxu0 0.0
    %1095 = vmatprep.subr.mxu0 0.0
    %1096 = vmatpush1.xpose.msra.mxu0 0.0
    %1097 = vmatprep.subr.mxu0 0.0
    %1098 = vmatpush1.xpose.msra.mxu0 0.0
    %1099 = vmatprep.subr.mxu0 0.0
    %1100 = vmatpush1.xpose.msra.mxu0 0.0
    %1101 = vmatprep.subr.mxu0 0.0
    %1102 = vmatpush1.xpose.msra.mxu0 0.0
    %1103 = vmatprep.subr.mxu0 0.0
    %1104 = vmatpush1.xpose.msra.mxu0 0.0
    %1105 = vmatprep.subr.mxu0 0.0
    %1106 = vmatpush1.xpose.msra.mxu0 0.0
    %1107 = vmatprep.subr.mxu0 0.0
    %1108 = vmatpush1.xpose.msra.mxu0 0.0
    %1109 = vmatprep.subr.mxu0 0.0
    %1110 = vmatpush1.xpose.msra.mxu0 0.0
    %1111 = vmatprep.subr.mxu0 0.0
    %1112 = vmatpush1.xpose.msra.mxu0 0.0
    %1113 = vmatprep.subr.mxu0 0.0
    %1114 = vmatpush1.xpose.msra.mxu0 0.0
    %1115 = vmatprep.subr.mxu0 0.0
    %1116 = vmatpush1.xpose.msra.mxu0 0.0
    %1117 = vmatprep.subr.mxu0 0.0
    %1118 = vmatpush1.xpose.msra.mxu0 0.0
    %1119 = vmatprep.subr.mxu0 0.0
    %1120 = vmatpush1.xpose.msra.mxu0 0.0
    %1121 = vmatprep.subr.mxu0 0.0
    %1122 = vmatpush1.xpose.msra.mxu0 0.0
    %1123 = vmatprep.subr.mxu0 0.0
    %1124 = vmatpush1.xpose.msra.mxu0 0.0
    %1125 = vmatprep.subr.mxu0 0.0
    %1126 = vmatpush1.xpose.msra.mxu0 0.0
    %1127 = vmatprep.subr.mxu0 0.0
    %1128 = vmatpush1.xpose.msra.mxu0 0.0
    %1129 = vmatprep.subr.mxu0 0.0
    %1130 = vmatpush1.xpose.msra.mxu0 0.0
    %1131 = vmatprep.subr.mxu0 0.0
    %1132 = vmatpush1.xpose.msra.mxu0 0.0
    %1133 = vmatprep.subr.mxu0 0.0
    %1134 = vmatpush1.xpose.msra.mxu0 0.0
    %1135 = vmatprep.subr.mxu0 0.0
    %1136 = vmatpush1.xpose.msra.mxu0 0.0
    %1137 = vmatprep.mubr.f32.mxu0 0.0
    %1138 = vmatmul.mubr.f32.gmra.mrb[0].mxu0 %v1069
    %v1139 = vpop.f32.mrb[0].mxu0
    %v1140 = vadd.f32 0.0, %v1139
    %v1141 = vpop.f32.mrb[0].mxu0
    %1142 = vdwg.mxu0
    %1143 = vrot.lane.b32.xlu0 %v197, 112
    %v1144 = vpop.permute.xlu0 %1143
    %1145 = vrot.lane.b32.xlu0 %v291, 112
    %v1146 = vpop.permute.xlu0 %1145
    %v1147 = vsel %vm404, %v1144, 0
    %v1149 = vsel %vm404, %v1146, 0
    %1151 = vmatprep.subr.mxu0 0.0
    %1152 = vmatpush1.xpose.msra.mxu0 %v1149
    %1153 = vmatprep.subr.mxu0 0.0
    %1154 = vmatpush1.xpose.msra.mxu0 0.0
    %1155 = vmatprep.subr.mxu0 0.0
    %1156 = vmatpush1.xpose.msra.mxu0 0.0
    %1157 = vmatprep.subr.mxu0 0.0
    %1158 = vmatpush1.xpose.msra.mxu0 0.0
    %1159 = vmatprep.subr.mxu0 0.0
    %1160 = vmatpush1.xpose.msra.mxu0 0.0
    %1161 = vmatprep.subr.mxu0 0.0
    %1162 = vmatpush1.xpose.msra.mxu0 0.0
    %1163 = vmatprep.subr.mxu0 0.0
    %1164 = vmatpush1.xpose.msra.mxu0 0.0
    %1165 = vmatprep.subr.mxu0 0.0
    %1166 = vmatpush1.xpose.msra.mxu0 0.0
    %1167 = vmatprep.subr.mxu0 0.0
    %1168 = vmatpush1.xpose.msra.mxu0 0.0
    %1169 = vmatprep.subr.mxu0 0.0
    %1170 = vmatpush1.xpose.msra.mxu0 0.0
    %1171 = vmatprep.subr.mxu0 0.0
    %1172 = vmatpush1.xpose.msra.mxu0 0.0
    %1173 = vmatprep.subr.mxu0 0.0
    %1174 = vmatpush1.xpose.msra.mxu0 0.0
    %1175 = vmatprep.subr.mxu0 0.0
    %1176 = vmatpush1.xpose.msra.mxu0 0.0
    %1177 = vmatprep.subr.mxu0 0.0
    %1178 = vmatpush1.xpose.msra.mxu0 0.0
    %1179 = vmatprep.subr.mxu0 0.0
    %1180 = vmatpush1.xpose.msra.mxu0 0.0
    %1181 = vmatprep.subr.mxu0 0.0
    %1182 = vmatpush1.xpose.msra.mxu0 0.0
    %1183 = vmatprep.subr.mxu0 0.0
    %1184 = vmatpush1.xpose.msra.mxu0 0.0
    %1185 = vmatprep.subr.mxu0 0.0
    %1186 = vmatpush1.xpose.msra.mxu0 0.0
    %1187 = vmatprep.subr.mxu0 0.0
    %1188 = vmatpush1.xpose.msra.mxu0 0.0
    %1189 = vmatprep.subr.mxu0 0.0
    %1190 = vmatpush1.xpose.msra.mxu0 0.0
    %1191 = vmatprep.subr.mxu0 0.0
    %1192 = vmatpush1.xpose.msra.mxu0 0.0
    %1193 = vmatprep.subr.mxu0 0.0
    %1194 = vmatpush1.xpose.msra.mxu0 0.0
    %1195 = vmatprep.subr.mxu0 0.0
    %1196 = vmatpush1.xpose.msra.mxu0 0.0
    %1197 = vmatprep.subr.mxu0 0.0
    %1198 = vmatpush1.xpose.msra.mxu0 0.0
    %1199 = vmatprep.subr.mxu0 0.0
    %1200 = vmatpush1.xpose.msra.mxu0 0.0
    %1201 = vmatprep.subr.mxu0 0.0
    %1202 = vmatpush1.xpose.msra.mxu0 0.0
    %1203 = vmatprep.subr.mxu0 0.0
    %1204 = vmatpush1.xpose.msra.mxu0 0.0
    %1205 = vmatprep.subr.mxu0 0.0
    %1206 = vmatpush1.xpose.msra.mxu0 0.0
    %1207 = vmatprep.subr.mxu0 0.0
    %1208 = vmatpush1.xpose.msra.mxu0 0.0
    %1209 = vmatprep.subr.mxu0 0.0
    %1210 = vmatpush1.xpose.msra.mxu0 0.0
    %1211 = vmatprep.subr.mxu0 0.0
    %1212 = vmatpush1.xpose.msra.mxu0 0.0
    %1213 = vmatprep.subr.mxu0 0.0
    %1214 = vmatpush1.xpose.msra.mxu0 0.0
    %1215 = vmatprep.mubr.f32.mxu0 0.0
    %1216 = vmatmul.mubr.f32.gmra.mrb[0].mxu0 %v1147
    %v1217 = vpop.f32.mrb[0].mxu0
    %v1218 = vadd.f32 0.0, %v1217
    %v1219 = vpop.f32.mrb[0].mxu0
    %1220 = vdwg.mxu0
    %v1221 = vmul.f32 %v1140, 0.35355338
    %v1222 = vmul.f32 %v1218, 0.35355338
    %v1223 = vsel %vm402, -1e+09, %v1221
    %v1224 = vsel %vm403, -1e+09, %v1222
    %v1225 = vsel %vm404, %v1223, -inf
    %1226 = vmax.xlane.f32.xlu0 %v1225
    %v1227 = vpop.xlane.xlu0 %1226
    %v1228 = vsel %vm404, %v1224, -inf
    %1229 = vmax.xlane.f32.xlu0 %v1228
    %v1230 = vpop.xlane.xlu0 %1229
    %v1231 = vsub.f32 %v1223, %v1227
    %v1232 = vsub.f32 %v1224, %v1230
    %v1233 = vmul.f32 %v1231, 1.442695
    %v1234 = vpow.pop %v1233
    %v1235 = vmul.f32 %v1232, 1.442695
    %v1236 = vpow.pop %v1235
    %v1237 = vsel %vm404, %v1234, 0.0
    %1238 = vadd.xlane.f32.xlu0 %v1237
    %v1239 = vpop.xlane.xlu0 %1238
    %v1240 = vsel %vm404, %v1236, 0.0
    %1241 = vadd.xlane.f32.xlu0 %v1240
    %v1242 = vpop.xlane.xlu0 %1241
    %v1243 = vrcp.pop %v1239
    %v1244 = vmul.f32 %v1234, %v1243
    %v1245 = vrcp.pop %v1242
    %v1246 = vmul.f32 %v1236, %v1245
    %1247 = vrot.lane.b32.xlu0 %v380, 112
    %v1248 = vpop.permute.xlu0 %1247
    %v1251 = vsel %vm404, %v1244, 0
    %1253 = vmatprep.subr.mxu0 0.0
    %1254 = vmatpush1.msra.mxu0 %v1248
    %1255 = vmatprep.subr.mxu0 0.0
    %1256 = vmatpush1.msra.mxu0 0.0
    %1257 = vmatprep.subr.mxu0 0.0
    %1258 = vmatpush1.msra.mxu0 0.0
    %1259 = vmatprep.subr.mxu0 0.0
    %1260 = vmatpush1.msra.mxu0 0.0
    %1261 = vmatprep.subr.mxu0 0.0
    %1262 = vmatpush1.msra.mxu0 0.0
    %1263 = vmatprep.subr.mxu0 0.0
    %1264 = vmatpush1.msra.mxu0 0.0
    %1265 = vmatprep.subr.mxu0 0.0
    %1266 = vmatpush1.msra.mxu0 0.0
    %1267 = vmatprep.subr.mxu0 0.0
    %1268 = vmatpush1.msra.mxu0 0.0
    %1269 = vmatprep.subr.mxu0 0.0
    %1270 = vmatpush1.msra.mxu0 0.0
    %1271 = vmatprep.subr.mxu0 0.0
    %1272 = vmatpush1.msra.mxu0 0.0
    %1273 = vmatprep.subr.mxu0 0.0
    %1274 = vmatpush1.msra.mxu0 0.0
    %1275 = vmatprep.subr.mxu0 0.0
    %1276 = vmatpush1.msra.mxu0 0.0
    %1277 = vmatprep.subr.mxu0 0.0
    %1278 = vmatpush1.msra.mxu0 0.0
    %1279 = vmatprep.subr.mxu0 0.0
    %1280 = vmatpush1.msra.mxu0 0.0
    %1281 = vmatprep.subr.mxu0 0.0
    %1282 = vmatpush1.msra.mxu0 0.0
    %1283 = vmatprep.subr.mxu0 0.0
    %1284 = vmatpush1.msra.mxu0 0.0
    %1285 = vmatprep.subr.mxu0 0.0
    %1286 = vmatpush1.msra.mxu0 0.0
    %1287 = vmatprep.subr.mxu0 0.0
    %1288 = vmatpush1.msra.mxu0 0.0
    %1289 = vmatprep.subr.mxu0 0.0
    %1290 = vmatpush1.msra.mxu0 0.0
    %1291 = vmatprep.subr.mxu0 0.0
    %1292 = vmatpush1.msra.mxu0 0.0
    %1293 = vmatprep.subr.mxu0 0.0
    %1294 = vmatpush1.msra.mxu0 0.0
    %1295 = vmatprep.subr.mxu0 0.0
    %1296 = vmatpush1.msra.mxu0 0.0
    %1297 = vmatprep.subr.mxu0 0.0
    %1298 = vmatpush1.msra.mxu0 0.0
    %1299 = vmatprep.subr.mxu0 0.0
    %1300 = vmatpush1.msra.mxu0 0.0
    %1301 = vmatprep.subr.mxu0 0.0
    %1302 = vmatpush1.msra.mxu0 0.0
    %1303 = vmatprep.subr.mxu0 0.0
    %1304 = vmatpush1.msra.mxu0 0.0
    %1305 = vmatprep.subr.mxu0 0.0
    %1306 = vmatpush1.msra.mxu0 0.0
    %1307 = vmatprep.subr.mxu0 0.0
    %1308 = vmatpush1.msra.mxu0 0.0
    %1309 = vmatprep.subr.mxu0 0.0
    %1310 = vmatpush1.msra.mxu0 0.0
    %1311 = vmatprep.subr.mxu0 0.0
    %1312 = vmatpush1.msra.mxu0 0.0
    %1313 = vmatprep.subr.mxu0 0.0
    %1314 = vmatpush1.msra.mxu0 0.0
    %1315 = vmatprep.subr.mxu0 0.0
    %1316 = vmatpush1.msra.mxu0 0.0
    %1317 = vmatprep.mubr.f32.mxu0 0.0
    %1318 = vmatmul.mubr.f32.gmra.mrb[0].mxu0 %v1251
    %v1319 = vpop.f32.mrb[0].mxu0
    %v1320 = vadd.f32 0.0, %v1319
    %v1321 = vpop.f32.mrb[0].mxu0
    %1322 = vdwg.mxu0
    %1323 = vrot.lane.b32.xlu0 %v385, 112
    %v1324 = vpop.permute.xlu0 %1323
    %v1327 = vsel %vm404, %v1246, 0
    %1329 = vmatprep.subr.mxu0 0.0
    %1330 = vmatpush1.msra.mxu0 %v1324
    %1331 = vmatprep.subr.mxu0 0.0
    %1332 = vmatpush1.msra.mxu0 0.0
    %1333 = vmatprep.subr.mxu0 0.0
    %1334 = vmatpush1.msra.mxu0 0.0
    %1335 = vmatprep.subr.mxu0 0.0
    %1336 = vmatpush1.msra.mxu0 0.0
    %1337 = vmatprep.subr.mxu0 0.0
    %1338 = vmatpush1.msra.mxu0 0.0
    %1339 = vmatprep.subr.mxu0 0.0
    %1340 = vmatpush1.msra.mxu0 0.0
    %1341 = vmatprep.subr.mxu0 0.0
    %1342 = vmatpush1.msra.mxu0 0.0
    %1343 = vmatprep.subr.mxu0 0.0
    %1344 = vmatpush1.msra.mxu0 0.0
    %1345 = vmatprep.subr.mxu0 0.0
    %1346 = vmatpush1.msra.mxu0 0.0
    %1347 = vmatprep.subr.mxu0 0.0
    %1348 = vmatpush1.msra.mxu0 0.0
    %1349 = vmatprep.subr.mxu0 0.0
    %1350 = vmatpush1.msra.mxu0 0.0
    %1351 = vmatprep.subr.mxu0 0.0
    %1352 = vmatpush1.msra.mxu0 0.0
    %1353 = vmatprep.subr.mxu0 0.0
    %1354 = vmatpush1.msra.mxu0 0.0
    %1355 = vmatprep.subr.mxu0 0.0
    %1356 = vmatpush1.msra.mxu0 0.0
    %1357 = vmatprep.subr.mxu0 0.0
    %1358 = vmatpush1.msra.mxu0 0.0
    %1359 = vmatprep.subr.mxu0 0.0
    %1360 = vmatpush1.msra.mxu0 0.0
    %1361 = vmatprep.subr.mxu0 0.0
    %1362 = vmatpush1.msra.mxu0 0.0
    %1363 = vmatprep.subr.mxu0 0.0
    %1364 = vmatpush1.msra.mxu0 0.0
    %1365 = vmatprep.subr.mxu0 0.0
    %1366 = vmatpush1.msra.mxu0 0.0
    %1367 = vmatprep.subr.mxu0 0.0
    %1368 = vmatpush1.msra.mxu0 0.0
    %1369 = vmatprep.subr.mxu0 0.0
    %1370 = vmatpush1.msra.mxu0 0.0
    %1371 = vmatprep.subr.mxu0 0.0
    %1372 = vmatpush1.msra.mxu0 0.0
    %1373 = vmatprep.subr.mxu0 0.0
    %1374 = vmatpush1.msra.mxu0 0.0
    %1375 = vmatprep.subr.mxu0 0.0
    %1376 = vmatpush1.msra.mxu0 0.0
    %1377 = vmatprep.subr.mxu0 0.0
    %1378 = vmatpush1.msra.mxu0 0.0
    %1379 = vmatprep.subr.mxu0 0.0
    %1380 = vmatpush1.msra.mxu0 0.0
    %1381 = vmatprep.subr.mxu0 0.0
    %1382 = vmatpush1.msra.mxu0 0.0
    %1383 = vmatprep.subr.mxu0 0.0
    %1384 = vmatpush1.msra.mxu0 0.0
    %1385 = vmatprep.subr.mxu0 0.0
    %1386 = vmatpush1.msra.mxu0 0.0
    %1387 = vmatprep.subr.mxu0 0.0
    %1388 = vmatpush1.msra.mxu0 0.0
    %1389 = vmatprep.subr.mxu0 0.0
    %1390 = vmatpush1.msra.mxu0 0.0
    %1391 = vmatprep.subr.mxu0 0.0
    %1392 = vmatpush1.msra.mxu0 0.0
    %1393 = vmatprep.mubr.f32.mxu0 0.0
    %1394 = vmatmul.mubr.f32.gmra.mrb[0].mxu0 %v1327
    %v1395 = vpop.f32.mrb[0].mxu0
    %v1396 = vadd.f32 0.0, %v1395
    %v1397 = vpop.f32.mrb[0].mxu0
    %1398 = vdwg.mxu0
    %1399 = vrot.lane.b32.xlu0 %v192, 104
    %v1400 = vpop.permute.xlu0 %1399
    %1401 = vrot.lane.b32.xlu0 %v286, 104
    %v1402 = vpop.permute.xlu0 %1401
    %v1403 = vsel %vm404, %v1400, 0
    %v1405 = vsel %vm404, %v1402, 0
    %1407 = vmatprep.subr.mxu0 0.0
    %1408 = vmatpush1.xpose.msra.mxu0 %v1405
    %1409 = vmatprep.subr.mxu0 0.0
    %1410 = vmatpush1.xpose.msra.mxu0 0.0
    %1411 = vmatprep.subr.mxu0 0.0
    %1412 = vmatpush1.xpose.msra.mxu0 0.0
    %1413 = vmatprep.subr.mxu0 0.0
    %1414 = vmatpush1.xpose.msra.mxu0 0.0
    %1415 = vmatprep.subr.mxu0 0.0
    %1416 = vmatpush1.xpose.msra.mxu0 0.0
    %1417 = vmatprep.subr.mxu0 0.0
    %1418 = vmatpush1.xpose.msra.mxu0 0.0
    %1419 = vmatprep.subr.mxu0 0.0
    %1420 = vmatpush1.xpose.msra.mxu0 0.0
    %1421 = vmatprep.subr.mxu0 0.0
    %1422 = vmatpush1.xpose.msra.mxu0 0.0
    %1423 = vmatprep.subr.mxu0 0.0
    %1424 = vmatpush1.xpose.msra.mxu0 0.0
    %1425 = vmatprep.subr.mxu0 0.0
    %1426 = vmatpush1.xpose.msra.mxu0 0.0
    %1427 = vmatprep.subr.mxu0 0.0
    %1428 = vmatpush1.xpose.msra.mxu0 0.0
    %1429 = vmatprep.subr.mxu0 0.0
    %1430 = vmatpush1.xpose.msra.mxu0 0.0
    %1431 = vmatprep.subr.mxu0 0.0
    %1432 = vmatpush1.xpose.msra.mxu0 0.0
    %1433 = vmatprep.subr.mxu0 0.0
    %1434 = vmatpush1.xpose.msra.mxu0 0.0
    %1435 = vmatprep.subr.mxu0 0.0
    %1436 = vmatpush1.xpose.msra.mxu0 0.0
    %1437 = vmatprep.subr.mxu0 0.0
    %1438 = vmatpush1.xpose.msra.mxu0 0.0
    %1439 = vmatprep.subr.mxu0 0.0
    %1440 = vmatpush1.xpose.msra.mxu0 0.0
    %1441 = vmatprep.subr.mxu0 0.0
    %1442 = vmatpush1.xpose.msra.mxu0 0.0
    %1443 = vmatprep.subr.mxu0 0.0
    %1444 = vmatpush1.xpose.msra.mxu0 0.0
    %1445 = vmatprep.subr.mxu0 0.0
    %1446 = vmatpush1.xpose.msra.mxu0 0.0
    %1447 = vmatprep.subr.mxu0 0.0
    %1448 = vmatpush1.xpose.msra.mxu0 0.0
    %1449 = vmatprep.subr.mxu0 0.0
    %1450 = vmatpush1.xpose.msra.mxu0 0.0
    %1451 = vmatprep.subr.mxu0 0.0
    %1452 = vmatpush1.xpose.msra.mxu0 0.0
    %1453 = vmatprep.subr.mxu0 0.0
    %1454 = vmatpush1.xpose.msra.mxu0 0.0
    %1455 = vmatprep.subr.mxu0 0.0
    %1456 = vmatpush1.xpose.msra.mxu0 0.0
    %1457 = vmatprep.subr.mxu0 0.0
    %1458 = vmatpush1.xpose.msra.mxu0 0.0
    %1459 = vmatprep.subr.mxu0 0.0
    %1460 = vmatpush1.xpose.msra.mxu0 0.0
    %1461 = vmatprep.subr.mxu0 0.0
    %1462 = vmatpush1.xpose.msra.mxu0 0.0
    %1463 = vmatprep.subr.mxu0 0.0
    %1464 = vmatpush1.xpose.msra.mxu0 0.0
    %1465 = vmatprep.subr.mxu0 0.0
    %1466 = vmatpush1.xpose.msra.mxu0 0.0
    %1467 = vmatprep.subr.mxu0 0.0
    %1468 = vmatpush1.xpose.msra.mxu0 0.0
    %1469 = vmatprep.subr.mxu0 0.0
    %1470 = vmatpush1.xpose.msra.mxu0 0.0
    %1471 = vmatprep.mubr.f32.mxu0 0.0
    %1472 = vmatmul.mubr.f32.gmra.mrb[0].mxu0 %v1403
    %v1473 = vpop.f32.mrb[0].mxu0
    %v1474 = vadd.f32 0.0, %v1473
    %v1475 = vpop.f32.mrb[0].mxu0
    %1476 = vdwg.mxu0
    %1477 = vrot.lane.b32.xlu0 %v197, 104
    %v1478 = vpop.permute.xlu0 %1477
    %1479 = vrot.lane.b32.xlu0 %v291, 104
    %v1480 = vpop.permute.xlu0 %1479
    %v1481 = vsel %vm404, %v1478, 0
    %v1483 = vsel %vm404, %v1480, 0
    %1485 = vmatprep.subr.mxu0 0.0
    %1486 = vmatpush1.xpose.msra.mxu0 %v1483
    %1487 = vmatprep.subr.mxu0 0.0
    %1488 = vmatpush1.xpose.msra.mxu0 0.0
    %1489 = vmatprep.subr.mxu0 0.0
    %1490 = vmatpush1.xpose.msra.mxu0 0.0
    %1491 = vmatprep.subr.mxu0 0.0
    %1492 = vmatpush1.xpose.msra.mxu0 0.0
    %1493 = vmatprep.subr.mxu0 0.0
    %1494 = vmatpush1.xpose.msra.mxu0 0.0
    %1495 = vmatprep.subr.mxu0 0.0
    %1496 = vmatpush1.xpose.msra.mxu0 0.0
    %1497 = vmatprep.subr.mxu0 0.0
    %1498 = vmatpush1.xpose.msra.mxu0 0.0
    %1499 = vmatprep.subr.mxu0 0.0
    %1500 = vmatpush1.xpose.msra.mxu0 0.0
    %1501 = vmatprep.subr.mxu0 0.0
    %1502 = vmatpush1.xpose.msra.mxu0 0.0
    %1503 = vmatprep.subr.mxu0 0.0
    %1504 = vmatpush1.xpose.msra.mxu0 0.0
    %1505 = vmatprep.subr.mxu0 0.0
    %1506 = vmatpush1.xpose.msra.mxu0 0.0
    %1507 = vmatprep.subr.mxu0 0.0
    %1508 = vmatpush1.xpose.msra.mxu0 0.0
    %1509 = vmatprep.subr.mxu0 0.0
    %1510 = vmatpush1.xpose.msra.mxu0 0.0
    %1511 = vmatprep.subr.mxu0 0.0
    %1512 = vmatpush1.xpose.msra.mxu0 0.0
    %1513 = vmatprep.subr.mxu0 0.0
    %1514 = vmatpush1.xpose.msra.mxu0 0.0
    %1515 = vmatprep.subr.mxu0 0.0
    %1516 = vmatpush1.xpose.msra.mxu0 0.0
    %1517 = vmatprep.subr.mxu0 0.0
    %1518 = vmatpush1.xpose.msra.mxu0 0.0
    %1519 = vmatprep.subr.mxu0 0.0
    %1520 = vmatpush1.xpose.msra.mxu0 0.0
    %1521 = vmatprep.subr.mxu0 0.0
    %1522 = vmatpush1.xpose.msra.mxu0 0.0
    %1523 = vmatprep.subr.mxu0 0.0
    %1524 = vmatpush1.xpose.msra.mxu0 0.0
    %1525 = vmatprep.subr.mxu0 0.0
    %1526 = vmatpush1.xpose.msra.mxu0 0.0
    %1527 = vmatprep.subr.mxu0 0.0
    %1528 = vmatpush1.xpose.msra.mxu0 0.0
    %1529 = vmatprep.subr.mxu0 0.0
    %1530 = vmatpush1.xpose.msra.mxu0 0.0
    %1531 = vmatprep.subr.mxu0 0.0
    %1532 = vmatpush1.xpose.msra.mxu0 0.0
    %1533 = vmatprep.subr.mxu0 0.0
    %1534 = vmatpush1.xpose.msra.mxu0 0.0
    %1535 = vmatprep.subr.mxu0 0.0
    %1536 = vmatpush1.xpose.msra.mxu0 0.0
    %1537 = vmatprep.subr.mxu0 0.0
    %1538 = vmatpush1.xpose.msra.mxu0 0.0
    %1539 = vmatprep.subr.mxu0 0.0
    %1540 = vmatpush1.xpose.msra.mxu0 0.0
    %1541 = vmatprep.subr.mxu0 0.0
    %1542 = vmatpush1.xpose.msra.mxu0 0.0
    %1543 = vmatprep.subr.mxu0 0.0
    %1544 = vmatpush1.xpose.msra.mxu0 0.0
    %1545 = vmatprep.subr.mxu0 0.0
    %1546 = vmatpush1.xpose.msra.mxu0 0.0
    %1547 = vmatprep.subr.mxu0 0.0
    %1548 = vmatpush1.xpose.msra.mxu0 0.0
    %1549 = vmatprep.mubr.f32.mxu0 0.0
    %1550 = vmatmul.mubr.f32.gmra.mrb[0].mxu0 %v1481
    %v1551 = vpop.f32.mrb[0].mxu0
    %v1552 = vadd.f32 0.0, %v1551
    %v1553 = vpop.f32.mrb[0].mxu0
    %1554 = vdwg.mxu0
    %v1555 = vmul.f32 %v1474, 0.35355338
    %v1556 = vmul.f32 %v1552, 0.35355338
    %v1557 = vsel %vm402, -1e+09, %v1555
    %v1558 = vsel %vm403, -1e+09, %v1556
    %v1559 = vsel %vm404, %v1557, -inf
    %1560 = vmax.xlane.f32.xlu0 %v1559
    %v1561 = vpop.xlane.xlu0 %1560
    %v1562 = vsel %vm404, %v1558, -inf
    %1563 = vmax.xlane.f32.xlu0 %v1562
    %v1564 = vpop.xlane.xlu0 %1563
    %v1565 = vsub.f32 %v1557, %v1561
    %v1566 = vsub.f32 %v1558, %v1564
    %v1567 = vmul.f32 %v1565, 1.442695
    %v1568 = vpow.pop %v1567
    %v1569 = vmul.f32 %v1566, 1.442695
    %v1570 = vpow.pop %v1569
    %v1571 = vsel %vm404, %v1568, 0.0
    %1572 = vadd.xlane.f32.xlu0 %v1571
    %v1573 = vpop.xlane.xlu0 %1572
    %v1574 = vsel %vm404, %v1570, 0.0
    %1575 = vadd.xlane.f32.xlu0 %v1574
    %v1576 = vpop.xlane.xlu0 %1575
    %v1577 = vrcp.pop %v1573
    %v1578 = vmul.f32 %v1568, %v1577
    %v1579 = vrcp.pop %v1576
    %v1580 = vmul.f32 %v1570, %v1579
    %1581 = vrot.lane.b32.xlu0 %v380, 104
    %v1582 = vpop.permute.xlu0 %1581
    %v1585 = vsel %vm404, %v1578, 0
    %1587 = vmatprep.subr.mxu0 0.0
    %1588 = vmatpush1.msra.mxu0 %v1582
    %1589 = vmatprep.subr.mxu0 0.0
    %1590 = vmatpush1.msra.mxu0 0.0
    %1591 = vmatprep.subr.mxu0 0.0
    %1592 = vmatpush1.msra.mxu0 0.0
    %1593 = vmatprep.subr.mxu0 0.0
    %1594 = vmatpush1.msra.mxu0 0.0
    %1595 = vmatprep.subr.mxu0 0.0
    %1596 = vmatpush1.msra.mxu0 0.0
    %1597 = vmatprep.subr.mxu0 0.0
    %1598 = vmatpush1.msra.mxu0 0.0
    %1599 = vmatprep.subr.mxu0 0.0
    %1600 = vmatpush1.msra.mxu0 0.0
    %1601 = vmatprep.subr.mxu0 0.0
    %1602 = vmatpush1.msra.mxu0 0.0
    %1603 = vmatprep.subr.mxu0 0.0
    %1604 = vmatpush1.msra.mxu0 0.0
    %1605 = vmatprep.subr.mxu0 0.0
    %1606 = vmatpush1.msra.mxu0 0.0
    %1607 = vmatprep.subr.mxu0 0.0
    %1608 = vmatpush1.msra.mxu0 0.0
    %1609 = vmatprep.subr.mxu0 0.0
    %1610 = vmatpush1.msra.mxu0 0.0
    %1611 = vmatprep.subr.mxu0 0.0
    %1612 = vmatpush1.msra.mxu0 0.0
    %1613 = vmatprep.subr.mxu0 0.0
    %1614 = vmatpush1.msra.mxu0 0.0
    %1615 = vmatprep.subr.mxu0 0.0
    %1616 = vmatpush1.msra.mxu0 0.0
    %1617 = vmatprep.subr.mxu0 0.0
    %1618 = vmatpush1.msra.mxu0 0.0
    %1619 = vmatprep.subr.mxu0 0.0
    %1620 = vmatpush1.msra.mxu0 0.0
    %1621 = vmatprep.subr.mxu0 0.0
    %1622 = vmatpush1.msra.mxu0 0.0
    %1623 = vmatprep.subr.mxu0 0.0
    %1624 = vmatpush1.msra.mxu0 0.0
    %1625 = vmatprep.subr.mxu0 0.0
    %1626 = vmatpush1.msra.mxu0 0.0
    %1627 = vmatprep.subr.mxu0 0.0
    %1628 = vmatpush1.msra.mxu0 0.0
    %1629 = vmatprep.subr.mxu0 0.0
    %1630 = vmatpush1.msra.mxu0 0.0
    %1631 = vmatprep.subr.mxu0 0.0
    %1632 = vmatpush1.msra.mxu0 0.0
    %1633 = vmatprep.subr.mxu0 0.0
    %1634 = vmatpush1.msra.mxu0 0.0
    %1635 = vmatprep.subr.mxu0 0.0
    %1636 = vmatpush1.msra.mxu0 0.0
    %1637 = vmatprep.subr.mxu0 0.0
    %1638 = vmatpush1.msra.mxu0 0.0
    %1639 = vmatprep.subr.mxu0 0.0
    %1640 = vmatpush1.msra.mxu0 0.0
    %1641 = vmatprep.subr.mxu0 0.0
    %1642 = vmatpush1.msra.mxu0 0.0
    %1643 = vmatprep.subr.mxu0 0.0
    %1644 = vmatpush1.msra.mxu0 0.0
    %1645 = vmatprep.subr.mxu0 0.0
    %1646 = vmatpush1.msra.mxu0 0.0
    %1647 = vmatprep.subr.mxu0 0.0
    %1648 = vmatpush1.msra.mxu0 0.0
    %1649 = vmatprep.subr.mxu0 0.0
    %1650 = vmatpush1.msra.mxu0 0.0
    %1651 = vmatprep.mubr.f32.mxu0 0.0
    %1652 = vmatmul.mubr.f32.gmra.mrb[0].mxu0 %v1585
    %v1653 = vpop.f32.mrb[0].mxu0
    %v1654 = vadd.f32 0.0, %v1653
    %v1655 = vpop.f32.mrb[0].mxu0
    %1656 = vdwg.mxu0
    %1657 = vrot.lane.b32.xlu0 %v385, 104
    %v1658 = vpop.permute.xlu0 %1657
    %v1661 = vsel %vm404, %v1580, 0
    %1663 = vmatprep.subr.mxu0 0.0
    %1664 = vmatpush1.msra.mxu0 %v1658
    %1665 = vmatprep.subr.mxu0 0.0
    %1666 = vmatpush1.msra.mxu0 0.0
    %1667 = vmatprep.subr.mxu0 0.0
    %1668 = vmatpush1.msra.mxu0 0.0
    %1669 = vmatprep.subr.mxu0 0.0
    %1670 = vmatpush1.msra.mxu0 0.0
    %1671 = vmatprep.subr.mxu0 0.0
    %1672 = vmatpush1.msra.mxu0 0.0
    %1673 = vmatprep.subr.mxu0 0.0
    %1674 = vmatpush1.msra.mxu0 0.0
    %1675 = vmatprep.subr.mxu0 0.0
    %1676 = vmatpush1.msra.mxu0 0.0
    %1677 = vmatprep.subr.mxu0 0.0
    %1678 = vmatpush1.msra.mxu0 0.0
    %1679 = vmatprep.subr.mxu0 0.0
    %1680 = vmatpush1.msra.mxu0 0.0
    %1681 = vmatprep.subr.mxu0 0.0
    %1682 = vmatpush1.msra.mxu0 0.0
    %1683 = vmatprep.subr.mxu0 0.0
    %1684 = vmatpush1.msra.mxu0 0.0
    %1685 = vmatprep.subr.mxu0 0.0
    %1686 = vmatpush1.msra.mxu0 0.0
    %1687 = vmatprep.subr.mxu0 0.0
    %1688 = vmatpush1.msra.mxu0 0.0
    %1689 = vmatprep.subr.mxu0 0.0
    %1690 = vmatpush1.msra.mxu0 0.0
    %1691 = vmatprep.subr.mxu0 0.0
    %1692 = vmatpush1.msra.mxu0 0.0
    %1693 = vmatprep.subr.mxu0 0.0
    %1694 = vmatpush1.msra.mxu0 0.0
    %1695 = vmatprep.subr.mxu0 0.0
    %1696 = vmatpush1.msra.mxu0 0.0
    %1697 = vmatprep.subr.mxu0 0.0
    %1698 = vmatpush1.msra.mxu0 0.0
    %1699 = vmatprep.subr.mxu0 0.0
    %1700 = vmatpush1.msra.mxu0 0.0
    %1701 = vmatprep.subr.mxu0 0.0
    %1702 = vmatpush1.msra.mxu0 0.0
    %1703 = vmatprep.subr.mxu0 0.0
    %1704 = vmatpush1.msra.mxu0 0.0
    %1705 = vmatprep.subr.mxu0 0.0
    %1706 = vmatpush1.msra.mxu0 0.0
    %1707 = vmatprep.subr.mxu0 0.0
    %1708 = vmatpush1.msra.mxu0 0.0
    %1709 = vmatprep.subr.mxu0 0.0
    %1710 = vmatpush1.msra.mxu0 0.0
    %1711 = vmatprep.subr.mxu0 0.0
    %1712 = vmatpush1.msra.mxu0 0.0
    %1713 = vmatprep.subr.mxu0 0.0
    %1714 = vmatpush1.msra.mxu0 0.0
    %1715 = vmatprep.subr.mxu0 0.0
    %1716 = vmatpush1.msra.mxu0 0.0
    %1717 = vmatprep.subr.mxu0 0.0
    %1718 = vmatpush1.msra.mxu0 0.0
    %1719 = vmatprep.subr.mxu0 0.0
    %1720 = vmatpush1.msra.mxu0 0.0
    %1721 = vmatprep.subr.mxu0 0.0
    %1722 = vmatpush1.msra.mxu0 0.0
    %1723 = vmatprep.subr.mxu0 0.0
    %1724 = vmatpush1.msra.mxu0 0.0
    %1725 = vmatprep.subr.mxu0 0.0
    %1726 = vmatpush1.msra.mxu0 0.0
    %1727 = vmatprep.mubr.f32.mxu0 0.0
    %1728 = vmatmul.mubr.f32.gmra.mrb[0].mxu0 %v1661
    %v1729 = vpop.f32.mrb[0].mxu0
    %v1730 = vadd.f32 0.0, %v1729
    %v1731 = vpop.f32.mrb[0].mxu0
    %1732 = vdwg.mxu0
    %1735 = vrot.lane.b32.xlu0 %v985, 8
    %v1736 = vpop.permute.xlu0 %1735
    %1737 = vrot.lane.b32.xlu0 %v1062, 8
    %v1738 = vpop.permute.xlu0 %1737
    %1743 = vrot.lane.b32.xlu0 %v1320, 16
    %v1744 = vpop.permute.xlu0 %1743
    %1745 = vrot.lane.b32.xlu0 %v1396, 16
    %v1746 = vpop.permute.xlu0 %1745
    %1751 = vrot.lane.b32.xlu0 %v1654, 24
    %v1752 = vpop.permute.xlu0 %1751
    %1753 = vrot.lane.b32.xlu0 %v1730, 24
    %v1754 = vpop.permute.xlu0 %1753
    %v1757 = vsel %vm404, %v653, %v1736
    %v1758 = vsel %vm404, %v726, %v1738
    %vm1759 = vcmask 130048
    %v1760 = vsel %vm1759, %v1757, %v1744
    %v1761 = vsel %vm1759, %v1758, %v1746
    %vm1762 = vcmask 195584
    %v1763 = vsel %vm1762, %v1760, %v1752
    %v1764 = vsel %vm1762, %v1761, %v1754
    %v1765 = vld [vmem:[#allocation10] sm:$0xff]
    %v1766 = vld [vmem:[#allocation10 + $0x8] sm:$0xff]
    %v1767 = vld [vmem:[#allocation10 + $0x10] sm:$0xff]
    %v1768 = vld [vmem:[#allocation10 + $0x18] sm:$0xff]
    %v1769 = vld [vmem:[%s7] sm:$0x1]
    %v1771 = vlaneseq
    %v1772 = vshrl.u32 %v1771, 7
    %v1773 = vsub.s32 0, %v1772
    %v1774 = vrot.slane %v1769, %v1773
    %v1777 = vsel %vm118, %v1763, 0
    %v1780 = vsel %vm118, %v1764, 0
    %1782 = vmatprep.subr.mxu0 0.0
    %1783 = vmatpush1.msra.mxu0 %v1765
    %1784 = vmatprep.subr.mxu0 0.0
    %1785 = vmatpush1.msra.mxu0 %v1766
    %1786 = vmatprep.subr.mxu0 0.0
    %1787 = vmatpush1.msra.mxu0 %v1767
    %1788 = vmatprep.subr.mxu0 0.0
    %1789 = vmatpush1.msra.mxu0 %v1768
    %1790 = vmatprep.subr.mxu0 0.0
    %1791 = vmatpush1.msra.mxu0 0.0
    %1792 = vmatprep.subr.mxu0 0.0
    %1793 = vmatpush1.msra.mxu0 0.0
    %1794 = vmatprep.subr.mxu0 0.0
    %1795 = vmatpush1.msra.mxu0 0.0
    %1796 = vmatprep.subr.mxu0 0.0
    %1797 = vmatpush1.msra.mxu0 0.0
    %1798 = vmatprep.subr.mxu0 0.0
    %1799 = vmatpush1.msra.mxu0 0.0
    %1800 = vmatprep.subr.mxu0 0.0
    %1801 = vmatpush1.msra.mxu0 0.0
    %1802 = vmatprep.subr.mxu0 0.0
    %1803 = vmatpush1.msra.mxu0 0.0
    %1804 = vmatprep.subr.mxu0 0.0
    %1805 = vmatpush1.msra.mxu0 0.0
    %1806 = vmatprep.subr.mxu0 0.0
    %1807 = vmatpush1.msra.mxu0 0.0
    %1808 = vmatprep.subr.mxu0 0.0
    %1809 = vmatpush1.msra.mxu0 0.0
    %1810 = vmatprep.subr.mxu0 0.0
    %1811 = vmatpush1.msra.mxu0 0.0
    %1812 = vmatprep.subr.mxu0 0.0
    %1813 = vmatpush1.msra.mxu0 0.0
    %1814 = vmatprep.subr.mxu0 0.0
    %1815 = vmatpush1.msra.mxu0 0.0
    %1816 = vmatprep.subr.mxu0 0.0
    %1817 = vmatpush1.msra.mxu0 0.0
    %1818 = vmatprep.subr.mxu0 0.0
    %1819 = vmatpush1.msra.mxu0 0.0
    %1820 = vmatprep.subr.mxu0 0.0
    %1821 = vmatpush1.msra.mxu0 0.0
    %1822 = vmatprep.subr.mxu0 0.0
    %1823 = vmatpush1.msra.mxu0 0.0
    %1824 = vmatprep.subr.mxu0 0.0
    %1825 = vmatpush1.msra.mxu0 0.0
    %1826 = vmatprep.subr.mxu0 0.0
    %1827 = vmatpush1.msra.mxu0 0.0
    %1828 = vmatprep.subr.mxu0 0.0
    %1829 = vmatpush1.msra.mxu0 0.0
    %1830 = vmatprep.subr.mxu0 0.0
    %1831 = vmatpush1.msra.mxu0 0.0
    %1832 = vmatprep.subr.mxu0 0.0
    %1833 = vmatpush1.msra.mxu0 0.0
    %1834 = vmatprep.subr.mxu0 0.0
    %1835 = vmatpush1.msra.mxu0 0.0
    %1836 = vmatprep.subr.mxu0 0.0
    %1837 = vmatpush1.msra.mxu0 0.0
    %1838 = vmatprep.subr.mxu0 0.0
    %1839 = vmatpush1.msra.mxu0 0.0
    %1840 = vmatprep.subr.mxu0 0.0
    %1841 = vmatpush1.msra.mxu0 0.0
    %1842 = vmatprep.subr.mxu0 0.0
    %1843 = vmatpush1.msra.mxu0 0.0
    %1844 = vmatprep.subr.mxu0 0.0
    %1845 = vmatpush1.msra.mxu0 0.0
    %1846 = vmatprep.mubr.f32.mxu0 0.0
    %1847 = vmatmul.mubr.f32.gmra.mrb[0].mxu0 %v1777
    %v1848 = vpop.f32.mrb[0].mxu0
    %v1849 = vadd.f32 %v1774, %v1848
    %v1850 = vpop.f32.mrb[0].mxu0
    %1851 = vmatprep.mubr.f32.mxu0 0.0
    %1852 = vmatmul.mubr.f32.gmra.mrb[0].mxu0 %v1780
    %v1853 = vpop.f32.mrb[0].mxu0
    %v1854 = vadd.f32 %v1774, %v1853
    %v1855 = vpop.f32.mrb[0].mxu0
    %1856 = vdwg.mxu0
    %1857 = vst.msk [vmem:[#allocation11] sm:$0xff] %vm118, %v1849
    %1858 = vst.msk [vmem:[#allocation11 + $0x8] sm:$0xff] %vm118, %v1854
    %1861 = vrot.lane.b32.xlu0 %v887, 8
    %v1862 = vpop.permute.xlu0 %1861
    %1863 = vrot.lane.b32.xlu0 %v888, 8
    %v1864 = vpop.permute.xlu0 %1863
    %1869 = vrot.lane.b32.xlu0 %v1223, 16
    %v1870 = vpop.permute.xlu0 %1869
    %1871 = vrot.lane.b32.xlu0 %v1224, 16
    %v1872 = vpop.permute.xlu0 %1871
    %1877 = vrot.lane.b32.xlu0 %v1557, 24
    %v1878 = vpop.permute.xlu0 %1877
    %1879 = vrot.lane.b32.xlu0 %v1558, 24
    %v1880 = vpop.permute.xlu0 %1879
    %v1883 = vsel %vm404, %v559, %v1862
    %v1884 = vsel %vm404, %v560, %v1864
    %v1885 = vsel %vm1759, %v1883, %v1870
    %v1886 = vsel %vm1759, %v1884, %v1872
    %v1887 = vsel %vm1762, %v1885, %v1878
    %v1888 = vsel %vm1762, %v1886, %v1880
    %1889 = vst.msk [vmem:[#allocation12] sm:$0xff] %vm118, %v1887
    %1890 = vst.msk [vmem:[#allocation12 + $0x8] sm:$0xff] %vm118, %v1888
    // Predicated region
    $region54: #{tpu_custom_call.1} parent=1 // pred_check
      _
    $region55: #{tpu_custom_call.1} parent=1 // pred_check_branch
      %1892 = sbr.rel (0) target = $region57
    $region56: #{tpu_custom_call.1} parent=1 // pred_region
      %s1894 = ssub.s32 256, 256
      %1895 = vsyncadd [#allocation4], %s1894
      %s1896 = sshll.u32 [#allocation11], 4
      %s1897 = int_to_ptr.vmem [resolvable:$true] %s1896
      %1902 = dma.vmem_to_hbm [thread:$0]  %s1897, 256, %s8, [#allocation4], 128, 128, 8
    $region57: #{tpu_custom_call.1} parent=1 // pred_fallthru
      _
    // Predicated region
    $region58: #{tpu_custom_call.1} parent=1 // pred_check
      _
    $region59: #{tpu_custom_call.1} parent=1 // pred_check_branch
      %1904 = sbr.rel (0) target = $region61
    $region60: #{tpu_custom_call.1} parent=1 // pred_region
      %s1906 = ssub.s32 256, 256
      %1907 = vsyncadd [#allocation13], %s1906
      %s1908 = sshll.u32 [#allocation12], 4
      %s1909 = int_to_ptr.vmem [resolvable:$true] %s1908
      %1914 = dma.vmem_to_hbm [thread:$0]  %s1909, 256, %s9, [#allocation13], 128, 128, 8
    $region61: #{tpu_custom_call.1} parent=1 // pred_fallthru
      _
    // Predicated region
    $region62: #{tpu_custom_call.1} parent=1 // pred_check
      _
    $region63: #{tpu_custom_call.1} parent=1 // pred_check_branch
      %1916 = sbr.rel (0) target = $region65
    $region64: #{tpu_custom_call.1} parent=1 // pred_region
      %1917 = dma.done [#allocation4], 256
    $region65: #{tpu_custom_call.1} parent=1 // pred_fallthru
      _
    // Predicated region
    $region66: #{tpu_custom_call.1} parent=1 // pred_check
      _
    $region67: #{tpu_custom_call.1} parent=1 // pred_check_branch
      %1919 = sbr.rel (0) target = $region69
    $region68: #{tpu_custom_call.1} parent=1 // pred_region
      %1920 = dma.done [#allocation13], 256
    $region69: #{tpu_custom_call.1} parent=1 // pred_fallthru
      _
    %1921 = vsyncpa [#allocation3], 1
    %1922 = vsyncpa [#allocation6], 1
    %1923 = vsyncpa [#allocation9], 1
    %1924 = vsyncpa [#allocation4], 1
    %1925 = vsyncpa [#allocation13], 1

</llo_original>
